<compile_context>
chip_gen: v6e
topology: v6e:2x2x1
jax: 0.10.0
libtpu: 0.0.40
codegen_flags: <defaults>
</compile_context>

<pallas_src>
import functools
import math

import jax
import jax.numpy as jnp
import numpy as np
from jax.experimental import pallas as pl
from jax.experimental.pallas import tpu as pltpu


def double_conv_kernel(x_ref, w1_ref, aff1_ref, w2_ref, aff2_ref, mask_ref,
                       o_ref, col_ref, hpad_ref, *, ksize, wp):
    K = ksize
    K2 = K * K
    p = K // 2
    C_in = x_ref.shape[1]
    C_out = o_ref.shape[1]
    Lout = o_ref.shape[2]          # H * Wp, multiple of 128
    Lpad = hpad_ref.shape[1]       # Hp * Wp + 2p (covers every tap shift)
    dot_dt = col_ref.dtype

    # ---- conv1: im2col from the host-padded input, one MXU dot ------------
    # Each tap is one lane-shifted slice of the whole (C_in, Lout) slab; the
    # K*K slices are stacked along sublanes into the im2col scratch.
    for t in range(K2):
        ki, kj = divmod(t, K)
        shift = ki * wp + kj
        col_ref[t * C_in:(t + 1) * C_in, :] = (
            x_ref[0, :, shift:shift + Lout].astype(dot_dt))
    z1 = jnp.dot(w1_ref[...], col_ref[0:K2 * C_in, :],
                 preferred_element_type=jnp.float32)        # (C_out, Lout)

    # Folded (bias + BN1) affine + ReLU, then zero the wrap/garbage columns
    # (flat positions with col >= W) so they act as conv2's zero padding.
    h1 = jnp.maximum(z1 * aff1_ref[0] + aff1_ref[1], 0.0)
    h1 = h1 * mask_ref[...]

    # Stage h1 into the padded flat layout with ONE lane-dense interior store;
    # only the uncovered border lanes need zeroing (interior is overwritten
    # every grid step, so no @pl.when(first-step) gating of scratch init).
    base = p * wp + p
    hpad_ref[:, 0:base] = jnp.zeros((C_out, base), jnp.float32)
    hpad_ref[:, base + Lout:Lpad] = jnp.zeros((C_out, Lpad - base - Lout),
                                              jnp.float32)
    hpad_ref[:, base:base + Lout] = h1

    # ---- conv2: im2col from the padded mid slab, one MXU dot ---------------
    for t in range(K2):
        ki, kj = divmod(t, K)
        shift = ki * wp + kj
        col_ref[t * C_out:(t + 1) * C_out, :] = (
            hpad_ref[:, shift:shift + Lout].astype(dot_dt))
    z2 = jnp.dot(w2_ref[...], col_ref[0:K2 * C_out, :],
                 preferred_element_type=jnp.float32)        # (C_out, Lout)

    h2 = jnp.maximum(z2 * aff2_ref[0] + aff2_ref[1], 0.0)
    # Lane-dense (multiple-of-128) store; wrapper strips the Wp-W wrap columns.
    o_ref[0] = h2.astype(o_ref.dtype)


def double_conv(x, w1, b1, bn1, w2, b2, bn2, *, eps=1e-5,
                dot_dtype=jnp.bfloat16):
    """Fused DoubleConv forward (inference-mode BatchNorm).

    x  : (B, C_in, H, W) f32
    w1 : (C_out, C_in, K, K), b1: (C_out,)
    bn1: (gamma, beta, running_mean, running_var), each (C_out,)
    w2 : (C_out, C_out, K, K), b2: (C_out,), bn2 like bn1
    dot_dtype: MXU operand dtype (bf16 recommended; f32 for strict accuracy)
    returns (B, C_out, H, W)
    """
    B, C_in, H, W = x.shape
    C_out, _, K, _ = w1.shape
    K2 = K * K
    p = K // 2
    Hp = H + 2 * p

    # Lane-dense padded row width: smallest Wp >= W + 2p with H*Wp % 128 == 0.
    g = 128 // math.gcd(H, 128)
    Wp = ((W + 2 * p + g - 1) // g) * g
    Lout = H * Wp                               # flattened accumulation length
    Lpad = Hp * Wp + 2 * p                      # == max tap shift + Lout

    # Host-side zero padding (tiny tensor): (p,p) rows, (p, Wp-W-p) columns,
    # flattened to row-stride Wp, plus 2p slack lanes so every tap slice is
    # in-bounds.  Cast to the MXU operand dtype up front (halves DMA for bf16).
    x_p = jnp.pad(x.astype(dot_dtype),
                  ((0, 0), (0, 0), (p, p), (p, Wp - W - p)))
    x_flat = jnp.pad(x_p.reshape(B, C_in, Hp * Wp),
                     ((0, 0), (0, 0), (0, 2 * p)))

    # Weights as (C_out, K2*C) matrices in (tap-major, channel-minor) order to
    # match the im2col row layout.
    w1_mat = jnp.transpose(w1, (0, 2, 3, 1)).reshape(C_out, K2 * C_in)
    w1_mat = w1_mat.astype(dot_dtype)
    w2_mat = jnp.transpose(w2, (0, 2, 3, 1)).reshape(C_out, K2 * C_out)
    w2_mat = w2_mat.astype(dot_dtype)

    def fold_affine(bias, bn):
        gamma, beta, mean, var = bn
        scale = gamma / jnp.sqrt(var + eps)
        shift = (bias - mean) * scale + beta
        return jnp.stack([scale, shift]).astype(jnp.float32)[:, :, None]

    aff1 = fold_affine(b1, bn1)                  # (2, C_out, 1)
    aff2 = fold_affine(b2, bn2)                  # (2, C_out, 1)

    # Mask zeroing the (Wp - W) wrap columns of the flattened padded layout.
    colmask = ((jnp.arange(Lout, dtype=jnp.int32) % Wp) < W)
    colmask = colmask.astype(jnp.float32)[None, :]          # (1, Lout)

    Crows = K2 * max(C_in, C_out)                # im2col scratch rows (reused)

    flops = 2 * B * Lout * C_out * K2 * (C_in + C_out) + 6 * B * Lout * C_out
    bytes_accessed = (x_flat.size * x_flat.dtype.itemsize
                      + w1_mat.size * w1_mat.dtype.itemsize
                      + w2_mat.size * w2_mat.dtype.itemsize
                      + 4 * (B * C_out * Lout + aff1.size + aff2.size
                             + colmask.size))

    kernel = functools.partial(double_conv_kernel, ksize=K, wp=Wp)

    out_flat = pl.pallas_call(
        kernel,
        out_shape=jax.ShapeDtypeStruct((B, C_out, Lout), jnp.float32),
        grid_spec=pltpu.PrefetchScalarGridSpec(
            num_scalar_prefetch=0,
            grid=(B,),
            in_specs=[
                pl.BlockSpec((1, C_in, Lpad), lambda b: (b, 0, 0)),
                pl.BlockSpec((C_out, K2 * C_in), lambda b: (0, 0)),
                pl.BlockSpec((2, C_out, 1), lambda b: (0, 0, 0)),
                pl.BlockSpec((C_out, K2 * C_out), lambda b: (0, 0)),
                pl.BlockSpec((2, C_out, 1), lambda b: (0, 0, 0)),
                pl.BlockSpec((1, Lout), lambda b: (0, 0)),
            ],
            out_specs=pl.BlockSpec((1, C_out, Lout), lambda b: (b, 0, 0)),
            scratch_shapes=[
                pltpu.VMEM((Crows, Lout), dot_dtype),     # im2col slab (reused)
                pltpu.VMEM((C_out, Lpad), jnp.float32),   # padded mid slab
            ],
        ),
        compiler_params=pltpu.CompilerParams(
            dimension_semantics=("parallel",)),
        cost_estimate=pl.CostEstimate(
            flops=int(flops), transcendentals=0,
            bytes_accessed=int(bytes_accessed)),
    )(x_flat, w1_mat, aff1, w2_mat, aff2, colmask)

    # Strip the Wp - W wrap columns and restore NCHW.
    out = out_flat.reshape(B, C_out, H, Wp)[:, :, :, :W]
    return out.astype(x.dtype)


def _reference(x, w1, b1, bn1, w2, b2, bn2, eps=1e-5):
    """Pure-JAX reference mirroring the PyTorch forward (eval-mode BN)."""
    def block(z, w, b, bn):
        gamma, beta, mean, var = bn
        p = w.shape[2] // 2
        z = jax.lax.conv_general_dilated(
            z, w, (1, 1), ((p, p), (p, p)),
            dimension_numbers=("NCHW", "OIHW", "NCHW"),
            precision=jax.lax.Precision.HIGHEST)
        z = z + b[None, :, None, None]
        z = ((z - mean[None, :, None, None])
             * (gamma / jnp.sqrt(var + eps))[None, :, None, None]
             + beta[None, :, None, None])
        return jnp.maximum(z, 0.0)
    return block(block(x, w1, b1, bn1), w2, b2, bn2)


if __name__ == "__main__":
    key = jax.random.PRNGKey(0)
    ks = jax.random.split(key, 13)

    B, C_in, C_out, H, W, K = 2, 4, 8, 16, 16, 3

    x = jax.random.normal(ks[0], (B, C_in, H, W), jnp.float32)

    w1 = 0.1 * jax.random.normal(ks[1], (C_out, C_in, K, K), jnp.float32)
    b1 = 0.1 * jax.random.normal(ks[2], (C_out,), jnp.float32)
    bn1 = (1.0 + 0.2 * jax.random.normal(ks[3], (C_out,), jnp.float32),
           0.1 * jax.random.normal(ks[4], (C_out,), jnp.float32),
           0.1 * jax.random.normal(ks[5], (C_out,), jnp.float32),
           jax.random.uniform(ks[6], (C_out,), jnp.float32, 0.5, 1.5))

    w2 = 0.1 * jax.random.normal(ks[7], (C_out, C_out, K, K), jnp.float32)
    b2 = 0.1 * jax.random.normal(ks[8], (C_out,), jnp.float32)
    bn2 = (1.0 + 0.2 * jax.random.normal(ks[9], (C_out,), jnp.float32),
           0.1 * jax.random.normal(ks[10], (C_out,), jnp.float32),
           0.1 * jax.random.normal(ks[11], (C_out,), jnp.float32),
           jax.random.uniform(ks[12], (C_out,), jnp.float32, 0.5, 1.5))

    ref = jax.block_until_ready(_reference(x, w1, b1, bn1, w2, b2, bn2))

    # Default bf16-MXU path (contraction depth 36/72 -> small compounding err).
    out_bf16 = jax.block_until_ready(
        double_conv(x, w1, b1, bn1, w2, b2, bn2, dot_dtype=jnp.bfloat16))
    np.testing.assert_allclose(np.asarray(out_bf16), np.asarray(ref),
                               rtol=2e-2, atol=2e-2)

    # f32-operand MXU path: matches the f32 reference tightly.
    out_f32 = jax.block_until_ready(
        double_conv(x, w1, b1, bn1, w2, b2, bn2, dot_dtype=jnp.float32))
    np.testing.assert_allclose(np.asarray(out_f32), np.asarray(ref),
                               rtol=1e-4, atol=1e-4)

    print("KERNEL_OK")
</pallas_src>

<mosaic_0001>
module attributes {stable_mosaic.version = 11 : i64} {
  func.func @double_conv_kernel(%arg0: i32, %arg1: memref<1x4x434xbf16, #tpu.memory_space<vmem>>, %arg2: memref<8x36xbf16, #tpu.memory_space<vmem>>, %arg3: memref<2x8x1xf32, #tpu.memory_space<vmem>>, %arg4: memref<8x72xbf16, #tpu.memory_space<vmem>>, %arg5: memref<2x8x1xf32, #tpu.memory_space<vmem>>, %arg6: memref<1x384xf32, #tpu.memory_space<vmem>>, %arg7: memref<1x8x384xf32, #tpu.memory_space<vmem>>, %arg8: memref<72x384xbf16, #tpu.memory_space<vmem>>, %arg9: memref<8x434xf32, #tpu.memory_space<vmem>>) attributes {dimension_semantics = [#tpu.dimension_semantics<parallel>], iteration_bounds = array<i64: 2>, scalar_prefetch = 0 : i64, scratch_operands = 2 : i64, tpu.core_type = #tpu.core_type<tc>, window_params = [{transform_indices = @transform_0, window_bounds = array<i64: 1, 4, 434>}, {pipeline_mode = #tpu.pipeline_mode<synchronous>, transform_indices = @transform_1, window_bounds = array<i64: 8, 36>}, {pipeline_mode = #tpu.pipeline_mode<synchronous>, transform_indices = @transform_2, window_bounds = array<i64: 2, 8, 1>}, {pipeline_mode = #tpu.pipeline_mode<synchronous>, transform_indices = @transform_3, window_bounds = array<i64: 8, 72>}, {pipeline_mode = #tpu.pipeline_mode<synchronous>, transform_indices = @transform_4, window_bounds = array<i64: 2, 8, 1>}, {pipeline_mode = #tpu.pipeline_mode<synchronous>, transform_indices = @transform_5, window_bounds = array<i64: 1, 384>}, {transform_indices = @transform_6, window_bounds = array<i64: 1, 8, 384>}]} {
    %c0 = arith.constant 0 : index
    %c0_0 = arith.constant 0 : index
    %c0_1 = arith.constant 0 : index
    %0 = vector.load %arg1[%c0, %c0_0, %c0_1] : memref<1x4x434xbf16, #tpu.memory_space<vmem>>, vector<1x4x384xbf16>
    %1 = vector.shape_cast %0 : vector<1x4x384xbf16> to vector<4x384xbf16>
    %c0_2 = arith.constant 0 : index
    %c0_3 = arith.constant 0 : index
    %2 = vector.load %arg8[%c0_2, %c0_3] : memref<72x384xbf16, #tpu.memory_space<vmem>>, vector<4x384xbf16>
    tpu.vector_store %arg8[%c0_2, %c0_3], %1 {strides = array<i32>} : memref<72x384xbf16, #tpu.memory_space<vmem>>, vector<4x384xbf16>,
    %c0_4 = arith.constant 0 : index
    %c0_5 = arith.constant 0 : index
    %c1 = arith.constant 1 : index
    %3 = vector.load %arg1[%c0_4, %c0_5, %c1] : memref<1x4x434xbf16, #tpu.memory_space<vmem>>, vector<1x4x384xbf16>
    %4 = vector.shape_cast %3 : vector<1x4x384xbf16> to vector<4x384xbf16>
    %c4 = arith.constant 4 : index
    %c0_6 = arith.constant 0 : index
    %5 = vector.load %arg8[%c4, %c0_6] : memref<72x384xbf16, #tpu.memory_space<vmem>>, vector<4x384xbf16>
    tpu.vector_store %arg8[%c4, %c0_6], %4 {strides = array<i32>} : memref<72x384xbf16, #tpu.memory_space<vmem>>, vector<4x384xbf16>,
    %c0_7 = arith.constant 0 : index
    %c0_8 = arith.constant 0 : index
    %c2 = arith.constant 2 : index
    %6 = vector.load %arg1[%c0_7, %c0_8, %c2] : memref<1x4x434xbf16, #tpu.memory_space<vmem>>, vector<1x4x384xbf16>
    %7 = vector.shape_cast %6 : vector<1x4x384xbf16> to vector<4x384xbf16>
    %c8 = arith.constant 8 : index
    %c0_9 = arith.constant 0 : index
    %8 = vector.load %arg8[%c8, %c0_9] : memref<72x384xbf16, #tpu.memory_space<vmem>>, vector<4x384xbf16>
    tpu.vector_store %arg8[%c8, %c0_9], %7 {strides = array<i32>} : memref<72x384xbf16, #tpu.memory_space<vmem>>, vector<4x384xbf16>,
    %c0_10 = arith.constant 0 : index
    %c0_11 = arith.constant 0 : index
    %c24 = arith.constant 24 : index
    %9 = vector.load %arg1[%c0_10, %c0_11, %c24] : memref<1x4x434xbf16, #tpu.memory_space<vmem>>, vector<1x4x384xbf16>
    %10 = vector.shape_cast %9 : vector<1x4x384xbf16> to vector<4x384xbf16>
    %c12 = arith.constant 12 : index
    %c0_12 = arith.constant 0 : index
    %11 = vector.load %arg8[%c12, %c0_12] : memref<72x384xbf16, #tpu.memory_space<vmem>>, vector<4x384xbf16>
    tpu.vector_store %arg8[%c12, %c0_12], %10 {strides = array<i32>} : memref<72x384xbf16, #tpu.memory_space<vmem>>, vector<4x384xbf16>,
    %c0_13 = arith.constant 0 : index
    %c0_14 = arith.constant 0 : index
    %c25 = arith.constant 25 : index
    %12 = vector.load %arg1[%c0_13, %c0_14, %c25] : memref<1x4x434xbf16, #tpu.memory_space<vmem>>, vector<1x4x384xbf16>
    %13 = vector.shape_cast %12 : vector<1x4x384xbf16> to vector<4x384xbf16>
    %c16 = arith.constant 16 : index
    %c0_15 = arith.constant 0 : index
    %14 = vector.load %arg8[%c16, %c0_15] : memref<72x384xbf16, #tpu.memory_space<vmem>>, vector<4x384xbf16>
    tpu.vector_store %arg8[%c16, %c0_15], %13 {strides = array<i32>} : memref<72x384xbf16, #tpu.memory_space<vmem>>, vector<4x384xbf16>,
    %c0_16 = arith.constant 0 : index
    %c0_17 = arith.constant 0 : index
    %c26 = arith.constant 26 : index
    %15 = vector.load %arg1[%c0_16, %c0_17, %c26] : memref<1x4x434xbf16, #tpu.memory_space<vmem>>, vector<1x4x384xbf16>
    %16 = vector.shape_cast %15 : vector<1x4x384xbf16> to vector<4x384xbf16>
    %c20 = arith.constant 20 : index
    %c0_18 = arith.constant 0 : index
    %17 = vector.load %arg8[%c20, %c0_18] : memref<72x384xbf16, #tpu.memory_space<vmem>>, vector<4x384xbf16>
    tpu.vector_store %arg8[%c20, %c0_18], %16 {strides = array<i32>} : memref<72x384xbf16, #tpu.memory_space<vmem>>, vector<4x384xbf16>,
    %c0_19 = arith.constant 0 : index
    %c0_20 = arith.constant 0 : index
    %c48 = arith.constant 48 : index
    %18 = vector.load %arg1[%c0_19, %c0_20, %c48] : memref<1x4x434xbf16, #tpu.memory_space<vmem>>, vector<1x4x384xbf16>
    %19 = vector.shape_cast %18 : vector<1x4x384xbf16> to vector<4x384xbf16>
    %c24_21 = arith.constant 24 : index
    %c0_22 = arith.constant 0 : index
    %20 = vector.load %arg8[%c24_21, %c0_22] : memref<72x384xbf16, #tpu.memory_space<vmem>>, vector<4x384xbf16>
    tpu.vector_store %arg8[%c24_21, %c0_22], %19 {strides = array<i32>} : memref<72x384xbf16, #tpu.memory_space<vmem>>, vector<4x384xbf16>,
    %c0_23 = arith.constant 0 : index
    %c0_24 = arith.constant 0 : index
    %c49 = arith.constant 49 : index
    %21 = vector.load %arg1[%c0_23, %c0_24, %c49] : memref<1x4x434xbf16, #tpu.memory_space<vmem>>, vector<1x4x384xbf16>
    %22 = vector.shape_cast %21 : vector<1x4x384xbf16> to vector<4x384xbf16>
    %c28 = arith.constant 28 : index
    %c0_25 = arith.constant 0 : index
    %23 = vector.load %arg8[%c28, %c0_25] : memref<72x384xbf16, #tpu.memory_space<vmem>>, vector<4x384xbf16>
    tpu.vector_store %arg8[%c28, %c0_25], %22 {strides = array<i32>} : memref<72x384xbf16, #tpu.memory_space<vmem>>, vector<4x384xbf16>,
    %c0_26 = arith.constant 0 : index
    %c0_27 = arith.constant 0 : index
    %c50 = arith.constant 50 : index
    %24 = vector.load %arg1[%c0_26, %c0_27, %c50] : memref<1x4x434xbf16, #tpu.memory_space<vmem>>, vector<1x4x384xbf16>
    %25 = vector.shape_cast %24 : vector<1x4x384xbf16> to vector<4x384xbf16>
    %c32 = arith.constant 32 : index
    %c0_28 = arith.constant 0 : index
    %26 = vector.load %arg8[%c32, %c0_28] : memref<72x384xbf16, #tpu.memory_space<vmem>>, vector<4x384xbf16>
    tpu.vector_store %arg8[%c32, %c0_28], %25 {strides = array<i32>} : memref<72x384xbf16, #tpu.memory_space<vmem>>, vector<4x384xbf16>,
    %c0_29 = arith.constant 0 : index
    %c0_30 = arith.constant 0 : index
    %27 = vector.load %arg2[%c0_29, %c0_30] : memref<8x36xbf16, #tpu.memory_space<vmem>>, vector<8x36xbf16>
    %c0_31 = arith.constant 0 : index
    %c0_32 = arith.constant 0 : index
    %28 = vector.load %arg8[%c0_31, %c0_32] : memref<72x384xbf16, #tpu.memory_space<vmem>>, vector<36x384xbf16>
    %cst = arith.constant dense<0.000000e+00> : vector<8x384xf32>
    %29 = tpu.matmul %27, %28, %cst {dimension_numbers = #tpu.dot_dimension_numbers<[1], [0], [0], [1], [0, 0, 1, 1], [], []>} : vector<8x36xbf16>, vector<36x384xbf16>, vector<8x384xf32> -> vector<8x384xf32>
    %c0_33 = arith.constant 0 : index
    %c0_34 = arith.constant 0 : index
    %c0_35 = arith.constant 0 : index
    %30 = vector.load %arg3[%c0_33, %c0_34, %c0_35] : memref<2x8x1xf32, #tpu.memory_space<vmem>>, vector<1x8x1xf32>
    %31 = vector.shape_cast %30 : vector<1x8x1xf32> to vector<8x1xf32>
    %32 = vector.broadcast %31 : vector<8x1xf32> to vector<8x384xf32>
    %33 = arith.mulf %29, %32 : vector<8x384xf32>
    %c1_36 = arith.constant 1 : index
    %c0_37 = arith.constant 0 : index
    %c0_38 = arith.constant 0 : index
    %34 = vector.load %arg3[%c1_36, %c0_37, %c0_38] : memref<2x8x1xf32, #tpu.memory_space<vmem>>, vector<1x8x1xf32>
    %35 = vector.shape_cast %34 : vector<1x8x1xf32> to vector<8x1xf32>
    %36 = vector.broadcast %35 : vector<8x1xf32> to vector<8x384xf32>
    %37 = arith.addf %33, %36 : vector<8x384xf32>
    %cst_39 = arith.constant 0.000000e+00 : f32
    %38 = vector.broadcast %cst_39 : f32 to vector<8x384xf32>
    %39 = arith.maximumf %37, %38 : vector<8x384xf32>
    %c0_40 = arith.constant 0 : index
    %c0_41 = arith.constant 0 : index
    %40 = vector.load %arg6[%c0_40, %c0_41] : memref<1x384xf32, #tpu.memory_space<vmem>>, vector<1x384xf32>
    %41 = vector.broadcast %40 : vector<1x384xf32> to vector<8x384xf32>
    %42 = arith.mulf %39, %41 : vector<8x384xf32>
    %cst_42 = arith.constant 0.000000e+00 : f32
    %43 = vector.broadcast %cst_42 : f32 to vector<8x25xf32>
    %c0_43 = arith.constant 0 : index
    %c0_44 = arith.constant 0 : index
    %44 = vector.load %arg9[%c0_43, %c0_44] : memref<8x434xf32, #tpu.memory_space<vmem>>, vector<8x25xf32>
    tpu.vector_store %arg9[%c0_43, %c0_44], %43 {strides = array<i32>} : memref<8x434xf32, #tpu.memory_space<vmem>>, vector<8x25xf32>,
    %cst_45 = arith.constant 0.000000e+00 : f32
    %45 = vector.broadcast %cst_45 : f32 to vector<8x25xf32>
    %c0_46 = arith.constant 0 : index
    %c409 = arith.constant 409 : index
    %46 = vector.load %arg9[%c0_46, %c409] : memref<8x434xf32, #tpu.memory_space<vmem>>, vector<8x25xf32>
    tpu.vector_store %arg9[%c0_46, %c409], %45 {strides = array<i32>} : memref<8x434xf32, #tpu.memory_space<vmem>>, vector<8x25xf32>,
    %c0_47 = arith.constant 0 : index
    %c25_48 = arith.constant 25 : index
    %47 = vector.load %arg9[%c0_47, %c25_48] : memref<8x434xf32, #tpu.memory_space<vmem>>, vector<8x384xf32>
    tpu.vector_store %arg9[%c0_47, %c25_48], %42 {strides = array<i32>} : memref<8x434xf32, #tpu.memory_space<vmem>>, vector<8x384xf32>,
    %c0_49 = arith.constant 0 : index
    %c0_50 = arith.constant 0 : index
    %48 = vector.load %arg9[%c0_49, %c0_50] : memref<8x434xf32, #tpu.memory_space<vmem>>, vector<8x384xf32>
    %49 = arith.truncf %48 : vector<8x384xf32> to vector<8x384xbf16>
    %c0_51 = arith.constant 0 : index
    %c0_52 = arith.constant 0 : index
    %50 = vector.load %arg8[%c0_51, %c0_52] : memref<72x384xbf16, #tpu.memory_space<vmem>>, vector<8x384xbf16>
    tpu.vector_store %arg8[%c0_51, %c0_52], %49 {strides = array<i32>} : memref<72x384xbf16, #tpu.memory_space<vmem>>, vector<8x384xbf16>,
    %c0_53 = arith.constant 0 : index
    %c1_54 = arith.constant 1 : index
    %51 = vector.load %arg9[%c0_53, %c1_54] : memref<8x434xf32, #tpu.memory_space<vmem>>, vector<8x384xf32>
    %52 = arith.truncf %51 : vector<8x384xf32> to vector<8x384xbf16>
    %c8_55 = arith.constant 8 : index
    %c0_56 = arith.constant 0 : index
    %53 = vector.load %arg8[%c8_55, %c0_56] : memref<72x384xbf16, #tpu.memory_space<vmem>>, vector<8x384xbf16>
    tpu.vector_store %arg8[%c8_55, %c0_56], %52 {strides = array<i32>} : memref<72x384xbf16, #tpu.memory_space<vmem>>, vector<8x384xbf16>,
    %c0_57 = arith.constant 0 : index
    %c2_58 = arith.constant 2 : index
    %54 = vector.load %arg9[%c0_57, %c2_58] : memref<8x434xf32, #tpu.memory_space<vmem>>, vector<8x384xf32>
    %55 = arith.truncf %54 : vector<8x384xf32> to vector<8x384xbf16>
    %c16_59 = arith.constant 16 : index
    %c0_60 = arith.constant 0 : index
    %56 = vector.load %arg8[%c16_59, %c0_60] : memref<72x384xbf16, #tpu.memory_space<vmem>>, vector<8x384xbf16>
    tpu.vector_store %arg8[%c16_59, %c0_60], %55 {strides = array<i32>} : memref<72x384xbf16, #tpu.memory_space<vmem>>, vector<8x384xbf16>,
    %c0_61 = arith.constant 0 : index
    %c24_62 = arith.constant 24 : index
    %57 = vector.load %arg9[%c0_61, %c24_62] : memref<8x434xf32, #tpu.memory_space<vmem>>, vector<8x384xf32>
    %58 = arith.truncf %57 : vector<8x384xf32> to vector<8x384xbf16>
    %c24_63 = arith.constant 24 : index
    %c0_64 = arith.constant 0 : index
    %59 = vector.load %arg8[%c24_63, %c0_64] : memref<72x384xbf16, #tpu.memory_space<vmem>>, vector<8x384xbf16>
    tpu.vector_store %arg8[%c24_63, %c0_64], %58 {strides = array<i32>} : memref<72x384xbf16, #tpu.memory_space<vmem>>, vector<8x384xbf16>,
    %c0_65 = arith.constant 0 : index
    %c25_66 = arith.constant 25 : index
    %60 = vector.load %arg9[%c0_65, %c25_66] : memref<8x434xf32, #tpu.memory_space<vmem>>, vector<8x384xf32>
    %61 = arith.truncf %60 : vector<8x384xf32> to vector<8x384xbf16>
    %c32_67 = arith.constant 32 : index
    %c0_68 = arith.constant 0 : index
    %62 = vector.load %arg8[%c32_67, %c0_68] : memref<72x384xbf16, #tpu.memory_space<vmem>>, vector<8x384xbf16>
    tpu.vector_store %arg8[%c32_67, %c0_68], %61 {strides = array<i32>} : memref<72x384xbf16, #tpu.memory_space<vmem>>, vector<8x384xbf16>,
    %c0_69 = arith.constant 0 : index
    %c26_70 = arith.constant 26 : index
    %63 = vector.load %arg9[%c0_69, %c26_70] : memref<8x434xf32, #tpu.memory_space<vmem>>, vector<8x384xf32>
    %64 = arith.truncf %63 : vector<8x384xf32> to vector<8x384xbf16>
    %c40 = arith.constant 40 : index
    %c0_71 = arith.constant 0 : index
    %65 = vector.load %arg8[%c40, %c0_71] : memref<72x384xbf16, #tpu.memory_space<vmem>>, vector<8x384xbf16>
    tpu.vector_store %arg8[%c40, %c0_71], %64 {strides = array<i32>} : memref<72x384xbf16, #tpu.memory_space<vmem>>, vector<8x384xbf16>,
    %c0_72 = arith.constant 0 : index
    %c48_73 = arith.constant 48 : index
    %66 = vector.load %arg9[%c0_72, %c48_73] : memref<8x434xf32, #tpu.memory_space<vmem>>, vector<8x384xf32>
    %67 = arith.truncf %66 : vector<8x384xf32> to vector<8x384xbf16>
    %c48_74 = arith.constant 48 : index
    %c0_75 = arith.constant 0 : index
    %68 = vector.load %arg8[%c48_74, %c0_75] : memref<72x384xbf16, #tpu.memory_space<vmem>>, vector<8x384xbf16>
    tpu.vector_store %arg8[%c48_74, %c0_75], %67 {strides = array<i32>} : memref<72x384xbf16, #tpu.memory_space<vmem>>, vector<8x384xbf16>,
    %c0_76 = arith.constant 0 : index
    %c49_77 = arith.constant 49 : index
    %69 = vector.load %arg9[%c0_76, %c49_77] : memref<8x434xf32, #tpu.memory_space<vmem>>, vector<8x384xf32>
    %70 = arith.truncf %69 : vector<8x384xf32> to vector<8x384xbf16>
    %c56 = arith.constant 56 : index
    %c0_78 = arith.constant 0 : index
    %71 = vector.load %arg8[%c56, %c0_78] : memref<72x384xbf16, #tpu.memory_space<vmem>>, vector<8x384xbf16>
    tpu.vector_store %arg8[%c56, %c0_78], %70 {strides = array<i32>} : memref<72x384xbf16, #tpu.memory_space<vmem>>, vector<8x384xbf16>,
    %c0_79 = arith.constant 0 : index
    %c50_80 = arith.constant 50 : index
    %72 = vector.load %arg9[%c0_79, %c50_80] : memref<8x434xf32, #tpu.memory_space<vmem>>, vector<8x384xf32>
    %73 = arith.truncf %72 : vector<8x384xf32> to vector<8x384xbf16>
    %c64 = arith.constant 64 : index
    %c0_81 = arith.constant 0 : index
    %74 = vector.load %arg8[%c64, %c0_81] : memref<72x384xbf16, #tpu.memory_space<vmem>>, vector<8x384xbf16>
    tpu.vector_store %arg8[%c64, %c0_81], %73 {strides = array<i32>} : memref<72x384xbf16, #tpu.memory_space<vmem>>, vector<8x384xbf16>,
    %c0_82 = arith.constant 0 : index
    %c0_83 = arith.constant 0 : index
    %75 = vector.load %arg4[%c0_82, %c0_83] : memref<8x72xbf16, #tpu.memory_space<vmem>>, vector<8x72xbf16>
    %c0_84 = arith.constant 0 : index
    %c0_85 = arith.constant 0 : index
    %76 = vector.load %arg8[%c0_84, %c0_85] : memref<72x384xbf16, #tpu.memory_space<vmem>>, vector<72x384xbf16>
    %cst_86 = arith.constant dense<0.000000e+00> : vector<8x384xf32>
    %77 = tpu.matmul %75, %76, %cst_86 {dimension_numbers = #tpu.dot_dimension_numbers<[1], [0], [0], [1], [0, 0, 1, 1], [], []>} : vector<8x72xbf16>, vector<72x384xbf16>, vector<8x384xf32> -> vector<8x384xf32>
    %c0_87 = arith.constant 0 : index
    %c0_88 = arith.constant 0 : index
    %c0_89 = arith.constant 0 : index
    %78 = vector.load %arg5[%c0_87, %c0_88, %c0_89] : memref<2x8x1xf32, #tpu.memory_space<vmem>>, vector<1x8x1xf32>
    %79 = vector.shape_cast %78 : vector<1x8x1xf32> to vector<8x1xf32>
    %80 = vector.broadcast %79 : vector<8x1xf32> to vector<8x384xf32>
    %81 = arith.mulf %77, %80 : vector<8x384xf32>
    %c1_90 = arith.constant 1 : index
    %c0_91 = arith.constant 0 : index
    %c0_92 = arith.constant 0 : index
    %82 = vector.load %arg5[%c1_90, %c0_91, %c0_92] : memref<2x8x1xf32, #tpu.memory_space<vmem>>, vector<1x8x1xf32>
    %83 = vector.shape_cast %82 : vector<1x8x1xf32> to vector<8x1xf32>
    %84 = vector.broadcast %83 : vector<8x1xf32> to vector<8x384xf32>
    %85 = arith.addf %81, %84 : vector<8x384xf32>
    %cst_93 = arith.constant 0.000000e+00 : f32
    %86 = vector.broadcast %cst_93 : f32 to vector<8x384xf32>
    %87 = arith.maximumf %85, %86 : vector<8x384xf32>
    %c0_94 = arith.constant 0 : index
    %c0_95 = arith.constant 0 : index
    %c0_96 = arith.constant 0 : index
    %88 = vector.load %arg7[%c0_94, %c0_95, %c0_96] : memref<1x8x384xf32, #tpu.memory_space<vmem>>, vector<1x8x384xf32>
    %89 = vector.shape_cast %88 : vector<1x8x384xf32> to vector<8x384xf32>
    %90 = vector.shape_cast %87 : vector<8x384xf32> to vector<1x8x384xf32>
    tpu.vector_store %arg7[%c0_94, %c0_95, %c0_96], %90 {strides = array<i32>} : memref<1x8x384xf32, #tpu.memory_space<vmem>>, vector<1x8x384xf32>,
    return
  }
  func.func @transform_0(%arg0: i32) -> (i32, i32, i32) {
    %c0_i32 = arith.constant 0 : i32
    %c0_i32_0 = arith.constant 0 : i32
    %c0_i32_1 = arith.constant 0 : i32
    return %arg0, %c0_i32, %c0_i32_0 : i32, i32, i32
  }
  func.func @transform_1(%arg0: i32) -> (i32, i32) {
    %c0_i32 = arith.constant 0 : i32
    %c0_i32_0 = arith.constant 0 : i32
    %c0_i32_1 = arith.constant 0 : i32
    return %c0_i32, %c0_i32_0 : i32, i32
  }
  func.func @transform_2(%arg0: i32) -> (i32, i32, i32) {
    %c0_i32 = arith.constant 0 : i32
    %c0_i32_0 = arith.constant 0 : i32
    %c0_i32_1 = arith.constant 0 : i32
    %c0_i32_2 = arith.constant 0 : i32
    return %c0_i32, %c0_i32_0, %c0_i32_1 : i32, i32, i32
  }
  func.func @transform_3(%arg0: i32) -> (i32, i32) {
    %c0_i32 = arith.constant 0 : i32
    %c0_i32_0 = arith.constant 0 : i32
    %c0_i32_1 = arith.constant 0 : i32
    return %c0_i32, %c0_i32_0 : i32, i32
  }
  func.func @transform_4(%arg0: i32) -> (i32, i32, i32) {
    %c0_i32 = arith.constant 0 : i32
    %c0_i32_0 = arith.constant 0 : i32
    %c0_i32_1 = arith.constant 0 : i32
    %c0_i32_2 = arith.constant 0 : i32
    return %c0_i32, %c0_i32_0, %c0_i32_1 : i32, i32, i32
  }
  func.func @transform_5(%arg0: i32) -> (i32, i32) {
    %c0_i32 = arith.constant 0 : i32
    %c0_i32_0 = arith.constant 0 : i32
    %c0_i32_1 = arith.constant 0 : i32
    return %c0_i32, %c0_i32_0 : i32, i32
  }
  func.func @transform_6(%arg0: i32) -> (i32, i32, i32) {
    %c0_i32 = arith.constant 0 : i32
    %c0_i32_0 = arith.constant 0 : i32
    %c0_i32_1 = arith.constant 0 : i32
    return %arg0, %c0_i32, %c0_i32_0 : i32, i32, i32
  }
}

</mosaic_0001>

<llo_original>
// kernel: tpu_custom_call.1
$region0: #{tpu_custom_call.1}
  #allocation0 [shape = 'u32[]', space=smem, size = 0x4, offset = 0x4, fixed_abs, tag = 'smem constant byte address 0x4 - core index']
  #allocation1 [shape = 'u32[144,128]{1,0:T(1,128)}', space=vmem, size = 0x12000, scoped, tag = 'internal scratch']
  #allocation2 [shape = 'bf16[72,384]{1,0:T(8,128)(2,1)}', space=vmem, size = 0xd800, scoped, tag = 'scratch operand']
  #allocation3 [shape = 'f32[8,434]{1,0:T(8,128)}', space=vmem, size = 0x4000, scoped, tag = 'scratch operand']
  %s0 = inlined_call_operand.vmem [shape: bf16[2,4,434], index: 0, kind: input, shape index: {}]
  %s1 = inlined_call_operand.vmem [shape: bf16[8,36], index: 1, kind: input, shape index: {}]
  %s2 = inlined_call_operand.vmem [shape: f32[2,8,1], index: 2, kind: input, shape index: {}]
  %s3 = inlined_call_operand.vmem [shape: bf16[8,72], index: 3, kind: input, shape index: {}]
  %s4 = inlined_call_operand.vmem [shape: f32[2,8,1], index: 4, kind: input, shape index: {}]
  %s5 = inlined_call_operand.vmem [shape: f32[1,384], index: 5, kind: input, shape index: {}]
  %s6 = inlined_call_operand.hbm [shape: f32[2,8,384], index: 6, kind: output, shape index: {}]
  %s7 = sld [smem:[#allocation0]]
  $region57: #{tpu_custom_call.1} parent=0
    _
  %s9 = ssub.s32 1, %s7
  %s10 = scalar_select 0, %s9, %s7
  $region1: #{tpu_custom_call.1} parent=0
    #allocation4 [shape = 'u8[24576]{0}', space=vmem, size = 0x6000, scoped, tag = 'output window, operand 0']
    #allocation5 [shape = 's32[2]{0}', space=sflag, size = 0x8, scoped, tag = 'scoped memory for tpu_custom_call.1']
    %11 = vsyncpa [#allocation5], 0
    %s12 = scalar_lea.sflag [#allocation5], 1
    %13 = vsyncpa %s12, 0
    loop: start=0, step=1, limit=4
    $region2: #{tpu_custom_call.1} parent=1 // loop_pre_header
      _
    $region3: #{tpu_custom_call.1} parent=1 // loop_header
      %s15 = sphi 0, %s19
      %p16 = scmp.ge.s32.totalorder %s15, 4
      %s25 = sphi 0, %s27
      %s28 = sphi 0, %s25
      %s29 = sphi 0, %s28
      %s45 = sphi 0, %s29
      %s49 = sphi 0, %s49
      %s51 = sphi 0, %s49
      %s52 = sphi 0, %s51
      %s66 = sphi 0, %s52
      %s70 = sphi 0, %s70
      %s72 = sphi 0, %s70
      %s73 = sphi 0, %s72
      %s87 = sphi 0, %s73
      %s91 = sphi 0, %s91
      %s93 = sphi 0, %s91
      %s94 = sphi 0, %s93
      %s108 = sphi 0, %s94
      %s112 = sphi 0, %s112
      %s114 = sphi 0, %s112
      %s115 = sphi 0, %s114
      %s129 = sphi 0, %s115
      %s133 = sphi 0, %s133
      %s135 = sphi 0, %s133
      %s136 = sphi 0, %s135
      %s150 = sphi 0, %s136
      %s156 = sphi 0, %s158
      %s159 = sphi 0, %s156
      %s160 = sphi 0, %s159
      %s176 = sphi 0, %s160
    $region4: #{tpu_custom_call.1} parent=1 // loop_header_branch
      %18 = sbr.rel (%p16) target = $region8
    $region5: #{tpu_custom_call.1} parent=1 // loop_body
      %s20 = ssub.s32 %s15, 1
      %s21 = ssub.s32 %s15, 2
      %s22 = sadd.s32 %s15, 1
      %s23 = ssub.s32 %s15, %s22
      %p24 = scmp.eq.s32.totalorder %s23, 0
      %s26 = sadd.s32 %s25, 1
      %s27 = scalar_select %p24, %s25, %s26
      %p30 = pneg %p24
      %p31 = scmp.eq.s32.totalorder %s15, 1
      %p32 = por %p30, %p31
      %p33 = scmp.ne.s32.totalorder %s25, %s28
      %p34 = scmp.eq.s32.totalorder %s15, 0
      %p35 = por %p33, %p34
      %p36 = scmp.ne.s32.totalorder %s25, %s28
      %p37 = scmp.eq.s32.totalorder %s20, 1
      %p38 = por %p36, %p37
      %p39 = scmp.ne.s32.totalorder %s28, %s29
      %p40 = scmp.eq.s32.totalorder %s20, 0
      %p41 = por %p39, %p40
      %p42 = scmp.ne.s32.totalorder %s28, %s29
      %p43 = scmp.eq.s32.totalorder %s21, 1
      %p44 = por %p42, %p43
      %p46 = scmp.ne.s32.totalorder %s29, %s45
      %p47 = scmp.eq.s32.totalorder %s21, 0
      %p48 = por %p46, %p47
      %s50 = sadd.s32 %s49, 1
      %p53 = scmp.eq.s32.totalorder %s15, 1
      %p54 = scmp.ne.s32.totalorder %s49, %s51
      %p55 = scmp.eq.s32.totalorder %s15, 0
      %p56 = por %p54, %p55
      %p57 = scmp.ne.s32.totalorder %s49, %s51
      %p58 = scmp.eq.s32.totalorder %s20, 1
      %p59 = por %p57, %p58
      %p60 = scmp.ne.s32.totalorder %s51, %s52
      %p61 = scmp.eq.s32.totalorder %s20, 0
      %p62 = por %p60, %p61
      %p63 = scmp.ne.s32.totalorder %s51, %s52
      %p64 = scmp.eq.s32.totalorder %s21, 1
      %p65 = por %p63, %p64
      %p67 = scmp.ne.s32.totalorder %s52, %s66
      %p68 = scmp.eq.s32.totalorder %s21, 0
      %p69 = por %p67, %p68
      %s71 = sadd.s32 %s70, 1
      %p74 = scmp.eq.s32.totalorder %s15, 1
      %p75 = scmp.ne.s32.totalorder %s70, %s72
      %p76 = scmp.eq.s32.totalorder %s15, 0
      %p77 = por %p75, %p76
      %p78 = scmp.ne.s32.totalorder %s70, %s72
      %p79 = scmp.eq.s32.totalorder %s20, 1
      %p80 = por %p78, %p79
      %p81 = scmp.ne.s32.totalorder %s72, %s73
      %p82 = scmp.eq.s32.totalorder %s20, 0
      %p83 = por %p81, %p82
      %p84 = scmp.ne.s32.totalorder %s72, %s73
      %p85 = scmp.eq.s32.totalorder %s21, 1
      %p86 = por %p84, %p85
      %p88 = scmp.ne.s32.totalorder %s73, %s87
      %p89 = scmp.eq.s32.totalorder %s21, 0
      %p90 = por %p88, %p89
      %s92 = sadd.s32 %s91, 1
      %p95 = scmp.eq.s32.totalorder %s15, 1
      %p96 = scmp.ne.s32.totalorder %s91, %s93
      %p97 = scmp.eq.s32.totalorder %s15, 0
      %p98 = por %p96, %p97
      %p99 = scmp.ne.s32.totalorder %s91, %s93
      %p100 = scmp.eq.s32.totalorder %s20, 1
      %p101 = por %p99, %p100
      %p102 = scmp.ne.s32.totalorder %s93, %s94
      %p103 = scmp.eq.s32.totalorder %s20, 0
      %p104 = por %p102, %p103
      %p105 = scmp.ne.s32.totalorder %s93, %s94
      %p106 = scmp.eq.s32.totalorder %s21, 1
      %p107 = por %p105, %p106
      %p109 = scmp.ne.s32.totalorder %s94, %s108
      %p110 = scmp.eq.s32.totalorder %s21, 0
      %p111 = por %p109, %p110
      %s113 = sadd.s32 %s112, 1
      %p116 = scmp.eq.s32.totalorder %s15, 1
      %p117 = scmp.ne.s32.totalorder %s112, %s114
      %p118 = scmp.eq.s32.totalorder %s15, 0
      %p119 = por %p117, %p118
      %p120 = scmp.ne.s32.totalorder %s112, %s114
      %p121 = scmp.eq.s32.totalorder %s20, 1
      %p122 = por %p120, %p121
      %p123 = scmp.ne.s32.totalorder %s114, %s115
      %p124 = scmp.eq.s32.totalorder %s20, 0
      %p125 = por %p123, %p124
      %p126 = scmp.ne.s32.totalorder %s114, %s115
      %p127 = scmp.eq.s32.totalorder %s21, 1
      %p128 = por %p126, %p127
      %p130 = scmp.ne.s32.totalorder %s115, %s129
      %p131 = scmp.eq.s32.totalorder %s21, 0
      %p132 = por %p130, %p131
      %s134 = sadd.s32 %s133, 1
      %p137 = scmp.eq.s32.totalorder %s15, 1
      %p138 = scmp.ne.s32.totalorder %s133, %s135
      %p139 = scmp.eq.s32.totalorder %s15, 0
      %p140 = por %p138, %p139
      %p141 = scmp.ne.s32.totalorder %s133, %s135
      %p142 = scmp.eq.s32.totalorder %s20, 1
      %p143 = por %p141, %p142
      %p144 = scmp.ne.s32.totalorder %s135, %s136
      %p145 = scmp.eq.s32.totalorder %s20, 0
      %p146 = por %p144, %p145
      %p147 = scmp.ne.s32.totalorder %s135, %s136
      %p148 = scmp.eq.s32.totalorder %s21, 1
      %p149 = por %p147, %p148
      %p151 = scmp.ne.s32.totalorder %s136, %s150
      %p152 = scmp.eq.s32.totalorder %s21, 0
      %p153 = por %p151, %p152
      %s154 = ssub.s32 %s15, %s22
      %p155 = scmp.eq.s32.totalorder %s154, 0
      %s157 = sadd.s32 %s156, 1
      %s158 = scalar_select %p155, %s156, %s157
      %p161 = pneg %p155
      %p162 = scmp.eq.s32.totalorder %s15, 1
      %p163 = por %p161, %p162
      %p164 = scmp.ne.s32.totalorder %s156, %s159
      %p165 = scmp.eq.s32.totalorder %s15, 0
      %p166 = por %p164, %p165
      %p167 = scmp.ne.s32.totalorder %s156, %s159
      %p168 = scmp.eq.s32.totalorder %s20, 1
      %p169 = por %p167, %p168
      %p170 = scmp.ne.s32.totalorder %s159, %s160
      %p171 = scmp.eq.s32.totalorder %s20, 0
      %p172 = por %p170, %p171
      %p173 = scmp.ne.s32.totalorder %s159, %s160
      %p174 = scmp.eq.s32.totalorder %s21, 1
      %p175 = por %p173, %p174
      %p177 = scmp.ne.s32.totalorder %s160, %s176
      %p178 = scmp.eq.s32.totalorder %s21, 0
      %p179 = por %p177, %p178
      %p180 = scmp.le.s32.totalorder 1, %s15
      %p181 = scmp.lt.s32.totalorder %s15, 3
      %p182 = pnand %p180, %p181
      %p183 = pneg %p182
      // Predicated region
      $region9: #{tpu_custom_call.1} parent=5 // pred_check
        _
      $region10: #{tpu_custom_call.1} parent=5 // pred_check_branch
        %185 = sbr.rel (%p182) target = $region12
      $region11: #{tpu_custom_call.1} parent=5 // pred_region
        %s186 = ssub.s32 %s15, 1
        // Predicated region
        $region13: #{tpu_custom_call.1} parent=11 // pred_check
          %p187 = pneg %p62
        $region14: #{tpu_custom_call.1} parent=11 // pred_check_branch
          %189 = sbr.rel (%p187) target = $region16
        $region15: #{tpu_custom_call.1} parent=11 // pred_region
          _
        $region16: #{tpu_custom_call.1} parent=11 // pred_fallthru
          _
        // Predicated region
        $region17: #{tpu_custom_call.1} parent=11 // pred_check
          %p190 = pneg %p83
        $region18: #{tpu_custom_call.1} parent=11 // pred_check_branch
          %192 = sbr.rel (%p190) target = $region20
        $region19: #{tpu_custom_call.1} parent=11 // pred_region
          _
        $region20: #{tpu_custom_call.1} parent=11 // pred_fallthru
          _
        // Predicated region
        $region21: #{tpu_custom_call.1} parent=11 // pred_check
          %p193 = pneg %p104
        $region22: #{tpu_custom_call.1} parent=11 // pred_check_branch
          %195 = sbr.rel (%p193) target = $region24
        $region23: #{tpu_custom_call.1} parent=11 // pred_region
          _
        $region24: #{tpu_custom_call.1} parent=11 // pred_fallthru
          _
        // Predicated region
        $region25: #{tpu_custom_call.1} parent=11 // pred_check
          %p196 = pneg %p125
        $region26: #{tpu_custom_call.1} parent=11 // pred_check_branch
          %198 = sbr.rel (%p196) target = $region28
        $region27: #{tpu_custom_call.1} parent=11 // pred_region
          _
        $region28: #{tpu_custom_call.1} parent=11 // pred_fallthru
          _
        // Predicated region
        $region29: #{tpu_custom_call.1} parent=11 // pred_check
          %p199 = pneg %p146
        $region30: #{tpu_custom_call.1} parent=11 // pred_check_branch
          %201 = sbr.rel (%p199) target = $region32
        $region31: #{tpu_custom_call.1} parent=11 // pred_region
          _
        $region32: #{tpu_custom_call.1} parent=11 // pred_fallthru
          _
      $region12: #{tpu_custom_call.1} parent=5 // pred_fallthru
        _
      %p202 = scmp.lt.s32.totalorder %s15, 2
      // Predicated region
      $region33: #{tpu_custom_call.1} parent=5 // pred_check
        %p203 = pneg %p202
      $region34: #{tpu_custom_call.1} parent=5 // pred_check_branch
        %205 = sbr.rel (%p203) target = $region36
      $region35: #{tpu_custom_call.1} parent=5 // pred_region
        // Predicated region
        $region37: #{tpu_custom_call.1} parent=35 // pred_check
          %p206 = pneg %p35
        $region38: #{tpu_custom_call.1} parent=35 // pred_check_branch
          %208 = sbr.rel (%p206) target = $region40
        $region39: #{tpu_custom_call.1} parent=35 // pred_region
          %p209 = scmp.lt.s32.totalorder %s15, 1
          %s210 = scalar_select %p209, %s15, 1
          %s211 = smul.addr %s210, 4
          %s212 = smul.addr %s211, 2
          %s213 = scalar_lea.vmem %s0, %s212
        $region40: #{tpu_custom_call.1} parent=35 // pred_fallthru
          _
      $region36: #{tpu_custom_call.1} parent=5 // pred_fallthru
        _
      %p214 = scmp.le.s32.totalorder 1, %s15
      %p215 = scmp.lt.s32.totalorder %s15, 3
      %p216 = pnand %p214, %p215
      %p217 = pneg %p216
      // Predicated region
      $region41: #{tpu_custom_call.1} parent=5 // pred_check
        _
      $region42: #{tpu_custom_call.1} parent=5 // pred_check_branch
        %219 = sbr.rel (%p216) target = $region44
      $region43: #{tpu_custom_call.1} parent=5 // pred_region
        %s220 = ssub.s32 %s15, 1
        %p221 = scmp.lt.s32.totalorder %s20, 1
        %s222 = scalar_select %p221, %s20, 1
        %s223 = smul.addr %s222, 4
        %s224 = smul.addr %s223, 2
        %s225 = scalar_lea.vmem %s0, %s224
        %p226 = pneg %p41
        %p227 = pneg %p38
        %p228 = pneg %p62
        %p229 = pneg %p59
        %p230 = pneg %p83
        %p231 = pneg %p80
        %p232 = pneg %p104
        %p233 = pneg %p101
        %p234 = pneg %p125
        %p235 = pneg %p122
        %p236 = pneg %p146
        %p237 = pneg %p143
        %p238 = pneg %p172
        %p239 = pneg %p169
        %s240 = sand.u32 %s159, 1
        %s241 = scalar_lea.sflag [#allocation5], %s240
        %s242 = sand.u32 %s159, 1
        %s243 = smul.addr %s242, 24
        %s244 = scalar_lea.vmem [#allocation4], %s243
        %p245 = scmp.lt.s32.totalorder %s20, 1
        %s246 = scalar_select %p245, %s20, 1
        %s247 = smul.addr %s246, 4
        %s248 = smul.addr %s247, 2
        %s249 = scalar_lea.vmem %s0, %s248
        %v251 = vld [vmem:[%s249] sm:$0x3f]
        %v253 = vcombine.high %v251, %v251
        %v255 = vunpack.c.l.s4 1983009808
        %v256 = vunpack.c.0.s8 %v255
        %v257 = vlaneseq
        %v258 = vshrl.u32 %v257, 7
        %v259 = vsub.s32 %v256, %v258
        %v260 = vrot.slane %v251, %v259
        %v262 = vunpack.c.l.s4 1983009808
        %v263 = vunpack.c.0.s8 %v262
        %v264 = vlaneseq
        %v265 = vshrl.u32 %v264, 7
        %v266 = vsub.s32 %v263, %v265
        %v267 = vrot.slane %v253, %v266
        %270 = vst [vmem:[#allocation2] sm:$0x33] %v260
        %271 = vst [vmem:[#allocation2 + $0x8] sm:$0x3] %v267
        %v272 = vld [vmem:[%s249] sm:$0xff]
        %v274 = vcombine.low %v272, %v272
        %v276 = vunpack.c.l.s4 1983009808
        %v277 = vunpack.c.0.s8 %v276
        %v278 = vlaneseq
        %v279 = vshrl.u32 %v278, 7
        %v280 = vsub.s32 %v277, %v279
        %v281 = vrot.slane %v274, %v280
        %v283 = vunpack.c.l.s4 1983009808
        %v284 = vunpack.c.0.s8 %v283
        %v285 = vlaneseq
        %v286 = vshrl.u32 %v285, 7
        %v287 = vsub.s32 %v284, %v286
        %v288 = vrot.slane %v272, %v287
        %289 = vrot.lane.b32.xlu0 %v281, 127
        %v290 = vpop.permute.xlu0 %289
        %291 = vrot.lane.b32.xlu0 %v288, 127
        %v292 = vpop.permute.xlu0 %291
        %v293 = vrot.slane %v290, 4
        %v294 = vrot.slane %v292, 4
        %vm295 = vcmask 1043456
        %v296 = vsel %vm295, %v293, %v294
        %vm297 = vcmask 1039360
        %v298 = vsel %vm297, %v290, %v296
        %v299 = vsel %vm297, %v292, %v294
        %302 = vst [vmem:[#allocation2] sm:$0xcc] %v298
        %303 = vst [vmem:[#allocation2 + $0x8] sm:$0xc] %v299
        %v304 = vld [vmem:[%s249] sm:$0xff]
        %v306 = vcombine.high %v304, %v304
        %v308 = vunpack.c.l.s4 1983009808
        %v309 = vunpack.c.0.s8 %v308
        %v310 = vlaneseq
        %v311 = vshrl.u32 %v310, 7
        %v312 = vsub.s32 %v309, %v311
        %v313 = vrot.slane %v304, %v312
        %v315 = vunpack.c.l.s4 1983009808
        %v316 = vunpack.c.0.s8 %v315
        %v317 = vlaneseq
        %v318 = vshrl.u32 %v317, 7
        %v319 = vsub.s32 %v316, %v318
        %v320 = vrot.slane %v306, %v319
        %321 = vrot.lane.b32.xlu0 %v313, 126
        %v322 = vpop.permute.xlu0 %321
        %323 = vrot.lane.b32.xlu0 %v320, 126
        %v324 = vpop.permute.xlu0 %323
        %v325 = vrot.slane %v322, 4
        %v326 = vrot.slane %v324, 4
        %v327 = vsel %vm295, %v325, %v326
        %vm328 = vcmask 1031168
        %v329 = vsel %vm328, %v322, %v327
        %v330 = vsel %vm328, %v324, %v326
        %333 = vst [vmem:[#allocation2 + $0xc] sm:$0x33] %v329
        %334 = vst [vmem:[#allocation2 + $0x14] sm:$0x3] %v330
        %v335 = vld [vmem:[%s249] sm:$0xff]
        %v337 = vcombine.low %v335, %v335
        %v339 = vunpack.c.l.s4 1983009808
        %v340 = vunpack.c.0.s8 %v339
        %v341 = vlaneseq
        %v342 = vshrl.u32 %v341, 7
        %v343 = vsub.s32 %v340, %v342
        %v344 = vrot.slane %v337, %v343
        %v346 = vunpack.c.l.s4 1983009808
        %v347 = vunpack.c.0.s8 %v346
        %v348 = vlaneseq
        %v349 = vshrl.u32 %v348, 7
        %v350 = vsub.s32 %v347, %v349
        %v351 = vrot.slane %v335, %v350
        %352 = vrot.lane.b32.xlu0 %v344, 104
        %v353 = vpop.permute.xlu0 %352
        %354 = vrot.lane.b32.xlu0 %v351, 104
        %v355 = vpop.permute.xlu0 %354
        %v356 = vrot.slane %v353, 4
        %v357 = vrot.slane %v355, 4
        %v358 = vsel %vm295, %v356, %v357
        %vm359 = vcmask 850944
        %v360 = vsel %vm359, %v353, %v358
        %v361 = vsel %vm359, %v355, %v357
        %364 = vst [vmem:[#allocation2 + $0xc] sm:$0xcc] %v360
        %365 = vst [vmem:[#allocation2 + $0x14] sm:$0xc] %v361
        %v366 = vld [vmem:[%s249] sm:$0xff]
        %v368 = vcombine.high %v366, %v366
        %v370 = vunpack.c.l.s4 1983009808
        %v371 = vunpack.c.0.s8 %v370
        %v372 = vlaneseq
        %v373 = vshrl.u32 %v372, 7
        %v374 = vsub.s32 %v371, %v373
        %v375 = vrot.slane %v366, %v374
        %v377 = vunpack.c.l.s4 1983009808
        %v378 = vunpack.c.0.s8 %v377
        %v379 = vlaneseq
        %v380 = vshrl.u32 %v379, 7
        %v381 = vsub.s32 %v378, %v380
        %v382 = vrot.slane %v368, %v381
        %383 = vrot.lane.b32.xlu0 %v375, 103
        %v384 = vpop.permute.xlu0 %383
        %385 = vrot.lane.b32.xlu0 %v382, 103
        %v386 = vpop.permute.xlu0 %385
        %v387 = vrot.slane %v384, 4
        %v388 = vrot.slane %v386, 4
        %v389 = vsel %vm295, %v387, %v388
        %vm390 = vcmask 842752
        %v391 = vsel %vm390, %v384, %v389
        %v392 = vsel %vm390, %v386, %v388
        %395 = vst [vmem:[#allocation2 + $0x18] sm:$0x33] %v391
        %396 = vst [vmem:[#allocation2 + $0x20] sm:$0x3] %v392
        %v397 = vld [vmem:[%s249] sm:$0xff]
        %v399 = vcombine.low %v397, %v397
        %v401 = vunpack.c.l.s4 1983009808
        %v402 = vunpack.c.0.s8 %v401
        %v403 = vlaneseq
        %v404 = vshrl.u32 %v403, 7
        %v405 = vsub.s32 %v402, %v404
        %v406 = vrot.slane %v399, %v405
        %v408 = vunpack.c.l.s4 1983009808
        %v409 = vunpack.c.0.s8 %v408
        %v410 = vlaneseq
        %v411 = vshrl.u32 %v410, 7
        %v412 = vsub.s32 %v409, %v411
        %v413 = vrot.slane %v397, %v412
        %414 = vrot.lane.b32.xlu0 %v406, 102
        %v415 = vpop.permute.xlu0 %414
        %416 = vrot.lane.b32.xlu0 %v413, 102
        %v417 = vpop.permute.xlu0 %416
        %v418 = vrot.slane %v415, 4
        %v419 = vrot.slane %v417, 4
        %v420 = vsel %vm295, %v418, %v419
        %vm421 = vcmask 834560
        %v422 = vsel %vm421, %v415, %v420
        %v423 = vsel %vm421, %v417, %v419
        %426 = vst [vmem:[#allocation2 + $0x18] sm:$0xcc] %v422
        %427 = vst [vmem:[#allocation2 + $0x20] sm:$0xc] %v423
        %v428 = vld [vmem:[%s249] sm:$0xff]
        %v430 = vcombine.high %v428, %v428
        %v432 = vunpack.c.l.s4 1983009808
        %v433 = vunpack.c.0.s8 %v432
        %v434 = vlaneseq
        %v435 = vshrl.u32 %v434, 7
        %v436 = vsub.s32 %v433, %v435
        %v437 = vrot.slane %v428, %v436
        %v439 = vunpack.c.l.s4 1983009808
        %v440 = vunpack.c.0.s8 %v439
        %v441 = vlaneseq
        %v442 = vshrl.u32 %v441, 7
        %v443 = vsub.s32 %v440, %v442
        %v444 = vrot.slane %v430, %v443
        %445 = vrot.lane.b32.xlu0 %v437, 80
        %v446 = vpop.permute.xlu0 %445
        %447 = vrot.lane.b32.xlu0 %v444, 80
        %v448 = vpop.permute.xlu0 %447
        %v449 = vrot.slane %v446, 4
        %v450 = vrot.slane %v448, 4
        %v451 = vsel %vm295, %v449, %v450
        %vm452 = vcmask 654336
        %v453 = vsel %vm452, %v446, %v451
        %v454 = vsel %vm452, %v448, %v450
        %457 = vst [vmem:[#allocation2 + $0x24] sm:$0x33] %v453
        %458 = vst [vmem:[#allocation2 + $0x2c] sm:$0x3] %v454
        %v459 = vld [vmem:[%s249] sm:$0xff]
        %v461 = vcombine.low %v459, %v459
        %v463 = vunpack.c.l.s4 1983009808
        %v464 = vunpack.c.0.s8 %v463
        %v465 = vlaneseq
        %v466 = vshrl.u32 %v465, 7
        %v467 = vsub.s32 %v464, %v466
        %v468 = vrot.slane %v461, %v467
        %v470 = vunpack.c.l.s4 1983009808
        %v471 = vunpack.c.0.s8 %v470
        %v472 = vlaneseq
        %v473 = vshrl.u32 %v472, 7
        %v474 = vsub.s32 %v471, %v473
        %v475 = vrot.slane %v459, %v474
        %476 = vrot.lane.b32.xlu0 %v468, 79
        %v477 = vpop.permute.xlu0 %476
        %478 = vrot.lane.b32.xlu0 %v475, 79
        %v479 = vpop.permute.xlu0 %478
        %v480 = vrot.slane %v477, 4
        %v481 = vrot.slane %v479, 4
        %v482 = vsel %vm295, %v480, %v481
        %vm483 = vcmask 646144
        %v484 = vsel %vm483, %v477, %v482
        %v485 = vsel %vm483, %v479, %v481
        %488 = vst [vmem:[#allocation2 + $0x24] sm:$0xcc] %v484
        %489 = vst [vmem:[#allocation2 + $0x2c] sm:$0xc] %v485
        %v490 = vld [vmem:[%s249] sm:$0xff]
        %v492 = vcombine.high %v490, %v490
        %v494 = vunpack.c.l.s4 1983009808
        %v495 = vunpack.c.0.s8 %v494
        %v496 = vlaneseq
        %v497 = vshrl.u32 %v496, 7
        %v498 = vsub.s32 %v495, %v497
        %v499 = vrot.slane %v490, %v498
        %v501 = vunpack.c.l.s4 1983009808
        %v502 = vunpack.c.0.s8 %v501
        %v503 = vlaneseq
        %v504 = vshrl.u32 %v503, 7
        %v505 = vsub.s32 %v502, %v504
        %v506 = vrot.slane %v492, %v505
        %507 = vrot.lane.b32.xlu0 %v499, 78
        %v508 = vpop.permute.xlu0 %507
        %509 = vrot.lane.b32.xlu0 %v506, 78
        %v510 = vpop.permute.xlu0 %509
        %v511 = vrot.slane %v508, 4
        %v512 = vrot.slane %v510, 4
        %v513 = vsel %vm295, %v511, %v512
        %vm514 = vcmask 637952
        %v515 = vsel %vm514, %v508, %v513
        %v516 = vsel %vm514, %v510, %v512
        %519 = vst [vmem:[#allocation2 + $0x30] sm:$0x33] %v515
        %520 = vst [vmem:[#allocation2 + $0x38] sm:$0x3] %v516
        %v521 = vld [vmem:[%s1] sm:$0xf]
        %v522 = vld [vmem:[#allocation2] sm:$0xff]
        %v523 = vld [vmem:[#allocation2 + $0x8] sm:$0xf]
        %v524 = vld [vmem:[#allocation2 + $0xc] sm:$0xff]
        %v525 = vld [vmem:[#allocation2 + $0x14] sm:$0xf]
        %v526 = vld [vmem:[#allocation2 + $0x18] sm:$0xff]
        %v527 = vld [vmem:[#allocation2 + $0x20] sm:$0xf]
        %v528 = vld [vmem:[#allocation2 + $0x24] sm:$0xff]
        %v529 = vld [vmem:[#allocation2 + $0x2c] sm:$0xf]
        %v530 = vld [vmem:[#allocation2 + $0x30] sm:$0x33]
        %v531 = vld [vmem:[#allocation2 + $0x38] sm:$0x3]
        %v542 = vunpack.c.l.b16 %v522
        %v543 = vunpack.c.h.b16 %v522
        %v544 = vunpack.c.l.b16 %v523
        %v545 = vunpack.c.l.b16 %v524
        %v546 = vunpack.c.h.b16 %v524
        %v547 = vunpack.c.l.b16 %v525
        %v548 = vunpack.c.l.b16 %v526
        %v549 = vunpack.c.h.b16 %v526
        %v550 = vunpack.c.l.b16 %v527
        %v551 = vunpack.c.l.b16 %v528
        %v552 = vunpack.c.h.b16 %v528
        %v553 = vunpack.c.l.b16 %v529
        %v554 = vunpack.c.l.b16 %v530
        %v555 = vunpack.c.h.b16 %v530
        %v556 = vunpack.c.l.b16 %v531
        %v557 = vpack.c.b16 %v545, %v542
        %v558 = vpack.c.b16 %v546, %v543
        %v559 = vpack.c.b16 %v547, %v544
        %v560 = vpack.c.b16 %v551, %v548
        %v561 = vpack.c.b16 %v552, %v549
        %v562 = vpack.c.b16 %v553, %v550
        %v563 = vpack.c.b16 %v554, %v554
        %v564 = vpack.c.b16 %v555, %v555
        %v565 = vpack.c.b16 %v556, %v556
        %vm572 = vcmask 293888
        %v574 = vsel %vm572, %v521, 0
        %vm576 = vcmask 1041408
        %v578 = vsel %vm576, %v563, 0
        %v581 = vsel %vm576, %v564, 0
        %v584 = vsel %vm576, %v565, 0
        %586 = vmatprep.subr.bf16.mxu0 0
        %587 = vmatpush1.bf16.msra.mxu0 0
        %588 = vmatprep.subr.bf16.mxu0 0
        %589 = vmatpush1.bf16.msra.mxu0 0
        %590 = vmatprep.subr.bf16.mxu0 0
        %591 = vmatpush1.bf16.msra.mxu0 0
        %592 = vmatprep.subr.bf16.mxu0 0
        %593 = vmatpush1.bf16.msra.mxu0 0
        %594 = vmatprep.subr.bf16.mxu0 0
        %595 = vmatpush1.bf16.msra.mxu0 0
        %596 = vmatprep.subr.bf16.mxu0 %v581
        %597 = vmatpush1.bf16.msra.mxu0 %v578
        %598 = vmatprep.subr.bf16.mxu0 %v561
        %599 = vmatpush1.bf16.msra.mxu0 %v560
        %600 = vmatprep.subr.bf16.mxu0 %v558
        %601 = vmatpush1.bf16.msra.mxu0 %v557
        %602 = vmatprep.subr.bf16.mxu0 0
        %603 = vmatpush2.bf16.msra.mxu0 0
        %604 = vmatprep.subr.bf16.mxu0 0
        %605 = vmatpush2.bf16.msra.mxu0 0
        %606 = vmatprep.subr.bf16.mxu0 0
        %607 = vmatpush2.bf16.msra.mxu0 0
        %608 = vmatprep.subr.bf16.mxu0 0
        %609 = vmatpush2.bf16.msra.mxu0 0
        %610 = vmatprep.subr.bf16.mxu0 0
        %611 = vmatpush2.bf16.msra.mxu0 0
        %612 = vmatprep.subr.bf16.mxu0 0
        %613 = vmatpush2.bf16.msra.mxu0 0
        %614 = vmatprep.subr.bf16.mxu0 0
        %615 = vmatpush2.bf16.msra.mxu0 0
        %616 = vmatprep.subr.bf16.mxu0 0
        %617 = vmatpush2.bf16.msra.mxu0 0
        %618 = vmatprep.mubr.bf16.mxu0 0
        %619 = vmatmul.mubr.bf16.gmra.mxu0 %v574
        %v620 = vpop.f32.mrf.mxu0
        %v621 = vadd.f32 0.0, %v620
        %v622 = vpop.f32.mrf.mxu0
        %v623 = vadd.f32 0.0, %v622
        %v624 = vpop.f32.mrf.mxu0
        %v625 = vpop.f32.mrf.mxu0
        %626 = vdwg.mxu0
        %627 = vmatprep.subr.bf16.mxu0 0
        %628 = vmatpush1.bf16.msra.mxu0 0
        %629 = vmatprep.subr.bf16.mxu0 0
        %630 = vmatpush1.bf16.msra.mxu0 0
        %631 = vmatprep.subr.bf16.mxu0 0
        %632 = vmatpush1.bf16.msra.mxu0 0
        %633 = vmatprep.subr.bf16.mxu0 0
        %634 = vmatpush1.bf16.msra.mxu0 0
        %635 = vmatprep.subr.bf16.mxu0 0
        %636 = vmatpush1.bf16.msra.mxu0 0
        %637 = vmatprep.subr.bf16.mxu0 0
        %638 = vmatpush1.bf16.msra.mxu0 %v584
        %639 = vmatprep.subr.bf16.mxu0 0
        %640 = vmatpush1.bf16.msra.mxu0 %v562
        %641 = vmatprep.subr.bf16.mxu0 0
        %642 = vmatpush1.bf16.msra.mxu0 %v559
        %643 = vmatprep.subr.bf16.mxu0 0
        %644 = vmatpush2.bf16.msra.mxu0 0
        %645 = vmatprep.subr.bf16.mxu0 0
        %646 = vmatpush2.bf16.msra.mxu0 0
        %647 = vmatprep.subr.bf16.mxu0 0
        %648 = vmatpush2.bf16.msra.mxu0 0
        %649 = vmatprep.subr.bf16.mxu0 0
        %650 = vmatpush2.bf16.msra.mxu0 0
        %651 = vmatprep.subr.bf16.mxu0 0
        %652 = vmatpush2.bf16.msra.mxu0 0
        %653 = vmatprep.subr.bf16.mxu0 0
        %654 = vmatpush2.bf16.msra.mxu0 0
        %655 = vmatprep.subr.bf16.mxu0 0
        %656 = vmatpush2.bf16.msra.mxu0 0
        %657 = vmatprep.subr.bf16.mxu0 0
        %658 = vmatpush2.bf16.msra.mxu0 0
        %659 = vmatprep.mubr.bf16.mxu0 0
        %660 = vmatmul.mubr.bf16.gmra.mxu0 %v574
        %v661 = vpop.f32.mrf.mxu0
        %v662 = vadd.f32 0.0, %v661
        %v663 = vpop.f32.mrf.mxu0
        %v664 = vpop.f32.mrf.mxu0
        %v665 = vpop.f32.mrf.mxu0
        %666 = vdwg.mxu0
        %v667 = vld [vmem:[%s2] sm:$0xff]
        %669 = vset.pattern.permute.xlu0 0
        %670 = vperm.xlu0 %669, %v667
        %v671 = vpop.permute.xlu0 %670
        %v673 = vmul.f32 %v621, %v671
        %v674 = vmul.f32 %v623, %v671
        %v675 = vmul.f32 %v662, %v671
        %s676 = scalar_lea.vmem %s2, 8
        %v677 = vld [vmem:[%s676] sm:$0xff]
        %679 = vset.pattern.permute.xlu0 0
        %680 = vperm.xlu0 %679, %v677
        %v681 = vpop.permute.xlu0 %680
        %v683 = vadd.f32 %v673, %v681
        %v684 = vadd.f32 %v674, %v681
        %v685 = vadd.f32 %v675, %v681
        %v686 = vmax.f32 %v683, 0.0
        %v687 = vmax.f32 %v684, 0.0
        %v688 = vmax.f32 %v685, 0.0
        %v689 = vld [vmem:[%s5] sm:$0x7]
        %v691 = vlaneseq
        %v692 = vshrl.u32 %v691, 7
        %v693 = vsub.s32 0, %v692
        %v694 = vrot.slane %v689, %v693
        %v695 = vlaneseq
        %v696 = vshrl.u32 %v695, 7
        %v697 = vsub.s32 1, %v696
        %v698 = vrot.slane %v689, %v697
        %v699 = vlaneseq
        %v700 = vshrl.u32 %v699, 7
        %v701 = vsub.s32 2, %v700
        %v702 = vrot.slane %v689, %v701
        %v706 = vmul.f32 %v686, %v694
        %v707 = vmul.f32 %v687, %v698
        %v708 = vmul.f32 %v688, %v702
        %vm709 = vcmask 203776
        %710 = vst.msk [vmem:[#allocation3] sm:$0xff] %vm709, 0.0
        %vm711 = vcmask 408776
        %712 = vst.msk [vmem:[#allocation3 + $0x18] sm:$0xff] %vm711, 0.0
        %716 = vrot.lane.b32.xlu0 %v706, 25
        %v717 = vpop.permute.xlu0 %716
        %718 = vrot.lane.b32.xlu0 %v707, 25
        %v719 = vpop.permute.xlu0 %718
        %720 = vrot.lane.b32.xlu0 %v708, 25
        %v721 = vpop.permute.xlu0 %720
        %v722 = vsel %vm709, %v717, %v719
        %v723 = vsel %vm709, %v719, %v721
        %vm728 = vcmask 1047752
        %729 = vst.msk [vmem:[#allocation3] sm:$0xff] %vm728, %v717
        %730 = vst [vmem:[#allocation3 + $0x8] sm:$0xff] %v722
        %731 = vst [vmem:[#allocation3 + $0x10] sm:$0xff] %v723
        %732 = vst.msk [vmem:[#allocation3 + $0x18] sm:$0xff] %vm709, %v721
        %v733 = vld [vmem:[#allocation3] sm:$0xff]
        %v734 = vld [vmem:[#allocation3 + $0x8] sm:$0xff]
        %v735 = vld [vmem:[#allocation3 + $0x10] sm:$0xff]
        %v736 = vpack.c.bf16 %v733, %v733
        %v737 = vpack.c.bf16 %v734, %v734
        %v738 = vpack.c.bf16 %v735, %v735
        %v742 = vunpack.c.l.b16 %v736
        %v743 = vunpack.c.l.b16 %v737
        %v744 = vunpack.c.l.b16 %v738
        %v745 = vpack.c.b16 %v743, %v742
        %v746 = vpack.c.b16 %v744, %v744
        %749 = vst [vmem:[#allocation2] sm:$0xff] %v745
        %750 = vst [vmem:[#allocation2 + $0x8] sm:$0xf] %v746
        %v751 = vld [vmem:[#allocation3] sm:$0xff]
        %v752 = vld [vmem:[#allocation3 + $0x8] sm:$0xff]
        %v753 = vld [vmem:[#allocation3 + $0x10] sm:$0xff]
        %v754 = vld [vmem:[#allocation3 + $0x18] sm:$0xff]
        %v755 = vpack.c.bf16 %v751, %v751
        %v756 = vpack.c.bf16 %v752, %v752
        %v757 = vpack.c.bf16 %v753, %v753
        %v758 = vpack.c.bf16 %v754, %v754
        %v763 = vunpack.c.l.b16 %v755
        %v764 = vunpack.c.l.b16 %v756
        %v765 = vunpack.c.l.b16 %v757
        %v766 = vunpack.c.l.b16 %v758
        %v767 = vpack.c.b16 %v764, %v763
        %v768 = vpack.c.b16 %v766, %v765
        %769 = vrot.lane.b32.xlu0 %v767, 127
        %v770 = vpop.permute.xlu0 %769
        %771 = vrot.lane.b32.xlu0 %v768, 127
        %v772 = vpop.permute.xlu0 %771
        %v773 = vrot.slane %v770, 4
        %v774 = vrot.slane %v772, 4
        %v775 = vsel %vm295, %v773, %v774
        %v776 = vsel %vm297, %v770, %v775
        %v777 = vsel %vm297, %v772, %v774
        %780 = vst [vmem:[#allocation2 + $0xc] sm:$0xff] %v776
        %781 = vst [vmem:[#allocation2 + $0x14] sm:$0xf] %v777
        %v782 = vld [vmem:[#allocation3] sm:$0xff]
        %v783 = vld [vmem:[#allocation3 + $0x8] sm:$0xff]
        %v784 = vld [vmem:[#allocation3 + $0x10] sm:$0xff]
        %v785 = vld [vmem:[#allocation3 + $0x18] sm:$0xff]
        %v786 = vpack.c.bf16 %v782, %v782
        %v787 = vpack.c.bf16 %v783, %v783
        %v788 = vpack.c.bf16 %v784, %v784
        %v789 = vpack.c.bf16 %v785, %v785
        %v794 = vunpack.c.l.b16 %v786
        %v795 = vunpack.c.l.b16 %v787
        %v796 = vunpack.c.l.b16 %v788
        %v797 = vunpack.c.l.b16 %v789
        %v798 = vpack.c.b16 %v795, %v794
        %v799 = vpack.c.b16 %v797, %v796
        %800 = vrot.lane.b32.xlu0 %v798, 126
        %v801 = vpop.permute.xlu0 %800
        %802 = vrot.lane.b32.xlu0 %v799, 126
        %v803 = vpop.permute.xlu0 %802
        %v804 = vrot.slane %v801, 4
        %v805 = vrot.slane %v803, 4
        %v806 = vsel %vm295, %v804, %v805
        %v807 = vsel %vm328, %v801, %v806
        %v808 = vsel %vm328, %v803, %v805
        %811 = vst [vmem:[#allocation2 + $0x18] sm:$0xff] %v807
        %812 = vst [vmem:[#allocation2 + $0x20] sm:$0xf] %v808
        %v813 = vld [vmem:[#allocation3] sm:$0xff]
        %v814 = vld [vmem:[#allocation3 + $0x8] sm:$0xff]
        %v815 = vld [vmem:[#allocation3 + $0x10] sm:$0xff]
        %v816 = vld [vmem:[#allocation3 + $0x18] sm:$0xff]
        %v817 = vpack.c.bf16 %v813, %v813
        %v818 = vpack.c.bf16 %v814, %v814
        %v819 = vpack.c.bf16 %v815, %v815
        %v820 = vpack.c.bf16 %v816, %v816
        %v825 = vunpack.c.l.b16 %v817
        %v826 = vunpack.c.l.b16 %v818
        %v827 = vunpack.c.l.b16 %v819
        %v828 = vunpack.c.l.b16 %v820
        %v829 = vpack.c.b16 %v826, %v825
        %v830 = vpack.c.b16 %v828, %v827
        %831 = vrot.lane.b32.xlu0 %v829, 104
        %v832 = vpop.permute.xlu0 %831
        %833 = vrot.lane.b32.xlu0 %v830, 104
        %v834 = vpop.permute.xlu0 %833
        %v835 = vrot.slane %v832, 4
        %v836 = vrot.slane %v834, 4
        %v837 = vsel %vm295, %v835, %v836
        %v838 = vsel %vm359, %v832, %v837
        %v839 = vsel %vm359, %v834, %v836
        %842 = vst [vmem:[#allocation2 + $0x24] sm:$0xff] %v838
        %843 = vst [vmem:[#allocation2 + $0x2c] sm:$0xf] %v839
        %v844 = vld [vmem:[#allocation3] sm:$0xff]
        %v845 = vld [vmem:[#allocation3 + $0x8] sm:$0xff]
        %v846 = vld [vmem:[#allocation3 + $0x10] sm:$0xff]
        %v847 = vld [vmem:[#allocation3 + $0x18] sm:$0xff]
        %v848 = vpack.c.bf16 %v844, %v844
        %v849 = vpack.c.bf16 %v845, %v845
        %v850 = vpack.c.bf16 %v846, %v846
        %v851 = vpack.c.bf16 %v847, %v847
        %v856 = vunpack.c.l.b16 %v848
        %v857 = vunpack.c.l.b16 %v849
        %v858 = vunpack.c.l.b16 %v850
        %v859 = vunpack.c.l.b16 %v851
        %v860 = vpack.c.b16 %v857, %v856
        %v861 = vpack.c.b16 %v859, %v858
        %862 = vrot.lane.b32.xlu0 %v860, 103
        %v863 = vpop.permute.xlu0 %862
        %864 = vrot.lane.b32.xlu0 %v861, 103
        %v865 = vpop.permute.xlu0 %864
        %v866 = vrot.slane %v863, 4
        %v867 = vrot.slane %v865, 4
        %v868 = vsel %vm295, %v866, %v867
        %v869 = vsel %vm390, %v863, %v868
        %v870 = vsel %vm390, %v865, %v867
        %873 = vst [vmem:[#allocation2 + $0x30] sm:$0xff] %v869
        %874 = vst [vmem:[#allocation2 + $0x38] sm:$0xf] %v870
        %v875 = vld [vmem:[#allocation3] sm:$0xff]
        %v876 = vld [vmem:[#allocation3 + $0x8] sm:$0xff]
        %v877 = vld [vmem:[#allocation3 + $0x10] sm:$0xff]
        %v878 = vld [vmem:[#allocation3 + $0x18] sm:$0xff]
        %v879 = vpack.c.bf16 %v875, %v875
        %v880 = vpack.c.bf16 %v876, %v876
        %v881 = vpack.c.bf16 %v877, %v877
        %v882 = vpack.c.bf16 %v878, %v878
        %v887 = vunpack.c.l.b16 %v879
        %v888 = vunpack.c.l.b16 %v880
        %v889 = vunpack.c.l.b16 %v881
        %v890 = vunpack.c.l.b16 %v882
        %v891 = vpack.c.b16 %v888, %v887
        %v892 = vpack.c.b16 %v890, %v889
        %893 = vrot.lane.b32.xlu0 %v891, 102
        %v894 = vpop.permute.xlu0 %893
        %895 = vrot.lane.b32.xlu0 %v892, 102
        %v896 = vpop.permute.xlu0 %895
        %v897 = vrot.slane %v894, 4
        %v898 = vrot.slane %v896, 4
        %v899 = vsel %vm295, %v897, %v898
        %v900 = vsel %vm421, %v894, %v899
        %v901 = vsel %vm421, %v896, %v898
        %904 = vst [vmem:[#allocation2 + $0x3c] sm:$0xff] %v900
        %905 = vst [vmem:[#allocation2 + $0x44] sm:$0xf] %v901
        %v906 = vld [vmem:[#allocation3] sm:$0xff]
        %v907 = vld [vmem:[#allocation3 + $0x8] sm:$0xff]
        %v908 = vld [vmem:[#allocation3 + $0x10] sm:$0xff]
        %v909 = vld [vmem:[#allocation3 + $0x18] sm:$0xff]
        %v910 = vpack.c.bf16 %v906, %v906
        %v911 = vpack.c.bf16 %v907, %v907
        %v912 = vpack.c.bf16 %v908, %v908
        %v913 = vpack.c.bf16 %v909, %v909
        %v918 = vunpack.c.l.b16 %v910
        %v919 = vunpack.c.l.b16 %v911
        %v920 = vunpack.c.l.b16 %v912
        %v921 = vunpack.c.l.b16 %v913
        %v922 = vpack.c.b16 %v919, %v918
        %v923 = vpack.c.b16 %v921, %v920
        %924 = vrot.lane.b32.xlu0 %v922, 80
        %v925 = vpop.permute.xlu0 %924
        %926 = vrot.lane.b32.xlu0 %v923, 80
        %v927 = vpop.permute.xlu0 %926
        %v928 = vrot.slane %v925, 4
        %v929 = vrot.slane %v927, 4
        %v930 = vsel %vm295, %v928, %v929
        %v931 = vsel %vm452, %v925, %v930
        %v932 = vsel %vm452, %v927, %v929
        %935 = vst [vmem:[#allocation2 + $0x48] sm:$0xff] %v931
        %936 = vst [vmem:[#allocation2 + $0x50] sm:$0xf] %v932
        %v937 = vld [vmem:[#allocation3] sm:$0xff]
        %v938 = vld [vmem:[#allocation3 + $0x8] sm:$0xff]
        %v939 = vld [vmem:[#allocation3 + $0x10] sm:$0xff]
        %v940 = vld [vmem:[#allocation3 + $0x18] sm:$0xff]
        %v941 = vpack.c.bf16 %v937, %v937
        %v942 = vpack.c.bf16 %v938, %v938
        %v943 = vpack.c.bf16 %v939, %v939
        %v944 = vpack.c.bf16 %v940, %v940
        %v949 = vunpack.c.l.b16 %v941
        %v950 = vunpack.c.l.b16 %v942
        %v951 = vunpack.c.l.b16 %v943
        %v952 = vunpack.c.l.b16 %v944
        %v953 = vpack.c.b16 %v950, %v949
        %v954 = vpack.c.b16 %v952, %v951
        %955 = vrot.lane.b32.xlu0 %v953, 79
        %v956 = vpop.permute.xlu0 %955
        %957 = vrot.lane.b32.xlu0 %v954, 79
        %v958 = vpop.permute.xlu0 %957
        %v959 = vrot.slane %v956, 4
        %v960 = vrot.slane %v958, 4
        %v961 = vsel %vm295, %v959, %v960
        %v962 = vsel %vm483, %v956, %v961
        %v963 = vsel %vm483, %v958, %v960
        %966 = vst [vmem:[#allocation2 + $0x54] sm:$0xff] %v962
        %967 = vst [vmem:[#allocation2 + $0x5c] sm:$0xf] %v963
        %v968 = vld [vmem:[#allocation3] sm:$0xff]
        %v969 = vld [vmem:[#allocation3 + $0x8] sm:$0xff]
        %v970 = vld [vmem:[#allocation3 + $0x10] sm:$0xff]
        %v971 = vld [vmem:[#allocation3 + $0x18] sm:$0xff]
        %v972 = vpack.c.bf16 %v968, %v968
        %v973 = vpack.c.bf16 %v969, %v969
        %v974 = vpack.c.bf16 %v970, %v970
        %v975 = vpack.c.bf16 %v971, %v971
        %v980 = vunpack.c.l.b16 %v972
        %v981 = vunpack.c.l.b16 %v973
        %v982 = vunpack.c.l.b16 %v974
        %v983 = vunpack.c.l.b16 %v975
        %v984 = vpack.c.b16 %v981, %v980
        %v985 = vpack.c.b16 %v983, %v982
        %986 = vrot.lane.b32.xlu0 %v984, 78
        %v987 = vpop.permute.xlu0 %986
        %988 = vrot.lane.b32.xlu0 %v985, 78
        %v989 = vpop.permute.xlu0 %988
        %v990 = vrot.slane %v987, 4
        %v991 = vrot.slane %v989, 4
        %v992 = vsel %vm295, %v990, %v991
        %v993 = vsel %vm514, %v987, %v992
        %v994 = vsel %vm514, %v989, %v991
        %997 = vst [vmem:[#allocation2 + $0x60] sm:$0xff] %v993
        %998 = vst [vmem:[#allocation2 + $0x68] sm:$0xf] %v994
        %v999 = vld [vmem:[%s3] sm:$0xf]
        %v1000 = vld [vmem:[#allocation2] sm:$0xff]
        %v1001 = vld [vmem:[#allocation2 + $0x8] sm:$0xf]
        %v1002 = vld [vmem:[#allocation2 + $0xc] sm:$0xff]
        %v1003 = vld [vmem:[#allocation2 + $0x14] sm:$0xf]
        %v1004 = vld [vmem:[#allocation2 + $0x18] sm:$0xff]
        %v1005 = vld [vmem:[#allocation2 + $0x20] sm:$0xf]
        %v1006 = vld [vmem:[#allocation2 + $0x24] sm:$0xff]
        %v1007 = vld [vmem:[#allocation2 + $0x2c] sm:$0xf]
        %v1008 = vld [vmem:[#allocation2 + $0x30] sm:$0xff]
        %v1009 = vld [vmem:[#allocation2 + $0x38] sm:$0xf]
        %v1010 = vld [vmem:[#allocation2 + $0x3c] sm:$0xff]
        %v1011 = vld [vmem:[#allocation2 + $0x44] sm:$0xf]
        %v1012 = vld [vmem:[#allocation2 + $0x48] sm:$0xff]
        %v1013 = vld [vmem:[#allocation2 + $0x50] sm:$0xf]
        %v1014 = vld [vmem:[#allocation2 + $0x54] sm:$0xff]
        %v1015 = vld [vmem:[#allocation2 + $0x5c] sm:$0xf]
        %v1016 = vld [vmem:[#allocation2 + $0x60] sm:$0xff]
        %v1017 = vld [vmem:[#allocation2 + $0x68] sm:$0xf]
        %v1036 = vunpack.c.l.b16 %v1000
        %v1037 = vunpack.c.h.b16 %v1000
        %v1038 = vunpack.c.l.b16 %v1001
        %v1039 = vunpack.c.l.b16 %v1002
        %v1040 = vunpack.c.h.b16 %v1002
        %v1041 = vunpack.c.l.b16 %v1003
        %v1042 = vunpack.c.l.b16 %v1004
        %v1043 = vunpack.c.h.b16 %v1004
        %v1044 = vunpack.c.l.b16 %v1005
        %v1045 = vunpack.c.l.b16 %v1006
        %v1046 = vunpack.c.h.b16 %v1006
        %v1047 = vunpack.c.l.b16 %v1007
        %v1048 = vunpack.c.l.b16 %v1008
        %v1049 = vunpack.c.h.b16 %v1008
        %v1050 = vunpack.c.l.b16 %v1009
        %v1051 = vunpack.c.l.b16 %v1010
        %v1052 = vunpack.c.h.b16 %v1010
        %v1053 = vunpack.c.l.b16 %v1011
        %v1054 = vunpack.c.l.b16 %v1012
        %v1055 = vunpack.c.h.b16 %v1012
        %v1056 = vunpack.c.l.b16 %v1013
        %v1057 = vunpack.c.l.b16 %v1014
        %v1058 = vunpack.c.h.b16 %v1014
        %v1059 = vunpack.c.l.b16 %v1015
        %v1060 = vunpack.c.l.b16 %v1016
        %v1061 = vunpack.c.h.b16 %v1016
        %v1062 = vunpack.c.l.b16 %v1017
        %v1063 = vpack.c.b16 %v1039, %v1036
        %v1064 = vpack.c.b16 %v1040, %v1037
        %v1065 = vpack.c.b16 %v1041, %v1038
        %v1066 = vpack.c.b16 %v1045, %v1042
        %v1067 = vpack.c.b16 %v1046, %v1043
        %v1068 = vpack.c.b16 %v1047, %v1044
        %v1069 = vpack.c.b16 %v1051, %v1048
        %v1070 = vpack.c.b16 %v1052, %v1049
        %v1071 = vpack.c.b16 %v1053, %v1050
        %v1072 = vpack.c.b16 %v1057, %v1054
        %v1073 = vpack.c.b16 %v1058, %v1055
        %v1074 = vpack.c.b16 %v1059, %v1056
        %v1075 = vpack.c.b16 %v1060, %v1060
        %v1076 = vpack.c.b16 %v1061, %v1061
        %v1077 = vpack.c.b16 %v1062, %v1062
        %vm1090 = vcmask 588800
        %v1092 = vsel %vm1090, %v999, 0
        %vm1094 = vcmask 1043456
        %v1096 = vsel %vm1094, %v1075, 0
        %v1099 = vsel %vm1094, %v1076, 0
        %v1102 = vsel %vm1094, %v1077, 0
        %1104 = vmatprep.subr.bf16.mxu0 0
        %1105 = vmatpush1.bf16.msra.mxu0 0
        %1106 = vmatprep.subr.bf16.mxu0 0
        %1107 = vmatpush1.bf16.msra.mxu0 0
        %1108 = vmatprep.subr.bf16.mxu0 0
        %1109 = vmatpush1.bf16.msra.mxu0 0
        %1110 = vmatprep.subr.bf16.mxu0 %v1099
        %1111 = vmatpush1.bf16.msra.mxu0 %v1096
        %1112 = vmatprep.subr.bf16.mxu0 %v1073
        %1113 = vmatpush1.bf16.msra.mxu0 %v1072
        %1114 = vmatprep.subr.bf16.mxu0 %v1070
        %1115 = vmatpush1.bf16.msra.mxu0 %v1069
        %1116 = vmatprep.subr.bf16.mxu0 %v1067
        %1117 = vmatpush1.bf16.msra.mxu0 %v1066
        %1118 = vmatprep.subr.bf16.mxu0 %v1064
        %1119 = vmatpush1.bf16.msra.mxu0 %v1063
        %1120 = vmatprep.subr.bf16.mxu0 0
        %1121 = vmatpush2.bf16.msra.mxu0 0
        %1122 = vmatprep.subr.bf16.mxu0 0
        %1123 = vmatpush2.bf16.msra.mxu0 0
        %1124 = vmatprep.subr.bf16.mxu0 0
        %1125 = vmatpush2.bf16.msra.mxu0 0
        %1126 = vmatprep.subr.bf16.mxu0 0
        %1127 = vmatpush2.bf16.msra.mxu0 0
        %1128 = vmatprep.subr.bf16.mxu0 0
        %1129 = vmatpush2.bf16.msra.mxu0 0
        %1130 = vmatprep.subr.bf16.mxu0 0
        %1131 = vmatpush2.bf16.msra.mxu0 0
        %1132 = vmatprep.subr.bf16.mxu0 0
        %1133 = vmatpush2.bf16.msra.mxu0 0
        %1134 = vmatprep.subr.bf16.mxu0 0
        %1135 = vmatpush2.bf16.msra.mxu0 0
        %1136 = vmatprep.mubr.bf16.mxu0 0
        %1137 = vmatmul.mubr.bf16.gmra.mxu0 %v1092
        %v1138 = vpop.f32.mrf.mxu0
        %v1139 = vadd.f32 0.0, %v1138
        %v1140 = vpop.f32.mrf.mxu0
        %v1141 = vadd.f32 0.0, %v1140
        %v1142 = vpop.f32.mrf.mxu0
        %v1143 = vpop.f32.mrf.mxu0
        %1144 = vdwg.mxu0
        %1145 = vmatprep.subr.bf16.mxu0 0
        %1146 = vmatpush1.bf16.msra.mxu0 0
        %1147 = vmatprep.subr.bf16.mxu0 0
        %1148 = vmatpush1.bf16.msra.mxu0 0
        %1149 = vmatprep.subr.bf16.mxu0 0
        %1150 = vmatpush1.bf16.msra.mxu0 0
        %1151 = vmatprep.subr.bf16.mxu0 0
        %1152 = vmatpush1.bf16.msra.mxu0 %v1102
        %1153 = vmatprep.subr.bf16.mxu0 0
        %1154 = vmatpush1.bf16.msra.mxu0 %v1074
        %1155 = vmatprep.subr.bf16.mxu0 0
        %1156 = vmatpush1.bf16.msra.mxu0 %v1071
        %1157 = vmatprep.subr.bf16.mxu0 0
        %1158 = vmatpush1.bf16.msra.mxu0 %v1068
        %1159 = vmatprep.subr.bf16.mxu0 0
        %1160 = vmatpush1.bf16.msra.mxu0 %v1065
        %1161 = vmatprep.subr.bf16.mxu0 0
        %1162 = vmatpush2.bf16.msra.mxu0 0
        %1163 = vmatprep.subr.bf16.mxu0 0
        %1164 = vmatpush2.bf16.msra.mxu0 0
        %1165 = vmatprep.subr.bf16.mxu0 0
        %1166 = vmatpush2.bf16.msra.mxu0 0
        %1167 = vmatprep.subr.bf16.mxu0 0
        %1168 = vmatpush2.bf16.msra.mxu0 0
        %1169 = vmatprep.subr.bf16.mxu0 0
        %1170 = vmatpush2.bf16.msra.mxu0 0
        %1171 = vmatprep.subr.bf16.mxu0 0
        %1172 = vmatpush2.bf16.msra.mxu0 0
        %1173 = vmatprep.subr.bf16.mxu0 0
        %1174 = vmatpush2.bf16.msra.mxu0 0
        %1175 = vmatprep.subr.bf16.mxu0 0
        %1176 = vmatpush2.bf16.msra.mxu0 0
        %1177 = vmatprep.mubr.bf16.mxu0 0
        %1178 = vmatmul.mubr.bf16.gmra.mxu0 %v1092
        %v1179 = vpop.f32.mrf.mxu0
        %v1180 = vadd.f32 0.0, %v1179
        %v1181 = vpop.f32.mrf.mxu0
        %v1182 = vpop.f32.mrf.mxu0
        %v1183 = vpop.f32.mrf.mxu0
        %1184 = vdwg.mxu0
        %v1185 = vld [vmem:[%s4] sm:$0xff]
        %1187 = vset.pattern.permute.xlu0 0
        %1188 = vperm.xlu0 %1187, %v1185
        %v1189 = vpop.permute.xlu0 %1188
        %v1191 = vmul.f32 %v1139, %v1189
        %v1192 = vmul.f32 %v1141, %v1189
        %v1193 = vmul.f32 %v1180, %v1189
        %s1194 = scalar_lea.vmem %s4, 8
        %v1195 = vld [vmem:[%s1194] sm:$0xff]
        %1197 = vset.pattern.permute.xlu0 0
        %1198 = vperm.xlu0 %1197, %v1195
        %v1199 = vpop.permute.xlu0 %1198
        %v1201 = vadd.f32 %v1191, %v1199
        %v1202 = vadd.f32 %v1192, %v1199
        %v1203 = vadd.f32 %v1193, %v1199
        %v1204 = vmax.f32 %v1201, 0.0
        %v1205 = vmax.f32 %v1202, 0.0
        %v1206 = vmax.f32 %v1203, 0.0
        %1207 = vst [vmem:[%s244] sm:$0xff] %v1204
        %1208 = vst [vmem:[%s244 + $0x8] sm:$0xff] %v1205
        %1209 = vst [vmem:[%s244 + $0x10] sm:$0xff] %v1206
        %s1210 = sand.u32 %s159, 1
        %s1211 = scalar_lea.sflag [#allocation5], %s1210
        %s1212 = sand.u32 %s159, 1
        %s1213 = smul.addr %s1212, 24
        %s1214 = scalar_lea.vmem [#allocation4], %s1213
        // Predicated region
        $region45: #{tpu_custom_call.1} parent=43 // pred_check
          %p1215 = pneg %p169
        $region46: #{tpu_custom_call.1} parent=43 // pred_check_branch
          %1217 = sbr.rel (%p1215) target = $region48
        $region47: #{tpu_custom_call.1} parent=43 // pred_region
          %s1219 = ssub.s32 384, 384
          %1220 = vsyncadd %s1211, %s1219
          %s1221 = smul.addr %s20, 3
          %s1222 = smul.addr %s1221, 128
          %s1223 = scalar_lea.hbm %s6, %s1222
          %s1225 = sshll.u32 %s1214, 4
          %s1226 = int_to_ptr.vmem [resolvable:$true] %s1225
          %1228 = dma.vmem_to_hbm [thread:$0]  %s1226, 384, %s1223, %s1211
        $region48: #{tpu_custom_call.1} parent=43 // pred_fallthru
          _
      $region44: #{tpu_custom_call.1} parent=5 // pred_fallthru
        _
      %p1229 = scmp.le.s32.totalorder 2, %s15
      // Predicated region
      $region49: #{tpu_custom_call.1} parent=5 // pred_check
        %p1230 = pneg %p1229
      $region50: #{tpu_custom_call.1} parent=5 // pred_check_branch
        %1232 = sbr.rel (%p1230) target = $region52
      $region51: #{tpu_custom_call.1} parent=5 // pred_region
        %s1233 = ssub.s32 %s15, 2
        // Predicated region
        $region53: #{tpu_custom_call.1} parent=51 // pred_check
          %p1234 = pneg %p175
        $region54: #{tpu_custom_call.1} parent=51 // pred_check_branch
          %1236 = sbr.rel (%p1234) target = $region56
        $region55: #{tpu_custom_call.1} parent=51 // pred_region
          %s1237 = sand.u32 %s160, 1
          %s1238 = scalar_lea.sflag [#allocation5], %s1237
          %s1239 = sand.u32 %s160, 1
          %s1240 = smul.addr %s1239, 24
          %s1241 = scalar_lea.vmem [#allocation4], %s1240
          %1242 = dma.done %s1238, 384
        $region56: #{tpu_custom_call.1} parent=51 // pred_fallthru
          _
      $region52: #{tpu_custom_call.1} parent=5 // pred_fallthru
        _
    $region6: #{tpu_custom_call.1} parent=1 // loop_footer
      %s19 = sadd.s32 1, %s15
    $region7: #{tpu_custom_call.1} parent=1 // loop_footer_branch
      %14 = sbr.rel target = $region3
    $region8: #{tpu_custom_call.1} parent=1 // loop_exit
      _
    %1243 = vsyncpa [#allocation5], 1
    %s1244 = scalar_lea.sflag [#allocation5], 1
    %1245 = vsyncpa %s1244, 1

</llo_original>
